<compile_context>
chip_gen: v6e
topology: v6e:2x2x1
jax: 0.10.0
libtpu: 0.0.40
codegen_flags: <defaults>
</compile_context>

<pallas_src>
import functools
import math

import jax
import jax.numpy as jnp
from jax.experimental import pallas as pl
from jax.experimental.pallas import tpu as pltpu

LN_EPS = 1e-5  # PyTorch nn.LayerNorm default


def _layernorm(x, gamma, beta):
    x = x.astype(jnp.float32)
    mu = jnp.mean(x, axis=-1, keepdims=True)
    var = jnp.mean((x - mu) ** 2, axis=-1, keepdims=True)
    return (x - mu) * jax.lax.rsqrt(var + LN_EPS) * gamma + beta


def _erf_approx(z):
    # Abramowitz & Stegun 7.1.26 rational polynomial, |err| < 1.5e-7.
    # Uses only exp / div / where, which lower cleanly in Mosaic.
    a1, a2, a3, a4, a5 = (0.254829592, -0.284496736, 1.421413741,
                          -1.453152027, 1.061405429)
    p = 0.3275911
    za = jnp.abs(z)
    t = 1.0 / (1.0 + p * za)
    poly = ((((a5 * t + a4) * t + a3) * t + a2) * t + a1) * t
    e = 1.0 - poly * jnp.exp(-za * za)
    return jnp.where(z < 0.0, -e, e)


def _gelu_exact(x):
    # nn.GELU() default is the exact erf form.
    return x * 0.5 * (1.0 + _erf_approx(x * 0.7071067811865476))


# ---------------------------------------------------------------------------
# Main fused encoder kernel.  grid = (batch, layer):
#   layer == 0  : embedding LayerNorm into the resident hidden block
#   every layer : one full JarvisLayer on this batch's [S, H] rows
# ---------------------------------------------------------------------------
def encoder_kernel(x_emb_ref, mask_ref, emb_g_ref, emb_b_ref,
                   wqkv_ref, bqkv_ref, wi_ref, bi_ref, wo_ref, bo_ref,
                   g1_ref, b1_ref, g2_ref, b2_ref,
                   hidden_ref, ctx_scr, *, num_heads, head_dim):
    layer = pl.program_id(1)

    # ---- prologue (layer 0): embedding LayerNorm into the resident block ----
    @pl.when(layer == 0)
    def _():
        hidden_ref[0] = _layernorm(x_emb_ref[0], emb_g_ref[...],
                                   emb_b_ref[...]).astype(hidden_ref.dtype)

    x = hidden_ref[0].astype(jnp.float32)            # [S, H], VMEM-resident
    S, H = x.shape
    nh, hd = num_heads, head_dim

    # Additive key-position bias built in-kernel from the thin [1, 1, S] mask
    # row (matches the reference: (1 - mask) * -10000).  No dense bias in HBM.
    bias = (1.0 - mask_ref[...].astype(jnp.float32)) * -10000.0   # [1, 1, S]

    # Head-batched fused QKV projection.  wqkv is [nh, H, 3*hd] with the
    # 1/sqrt(hd) scale pre-folded into the Q columns; each head's q|k|v block
    # is contiguous, so the slices below are simple contiguous lane windows.
    xb = jnp.broadcast_to(x, (nh, S, H))
    qkv = jnp.einsum('hsd,hdk->hsk', xb, wqkv_ref[0],
                     preferred_element_type=jnp.float32) + bqkv_ref[0]  # [nh,S,3hd]
    q = qkv[..., :hd]
    k = qkv[..., hd:2 * hd]
    v = qkv[..., 2 * hd:]

    # Batched attention over the head dimension (natural-order dot_generals).
    s = jnp.einsum('hqd,hkd->hqk', q, k,
                   preferred_element_type=jnp.float32) + bias           # [nh,S,S]
    s = s - jnp.max(s, axis=-1, keepdims=True)
    p = jnp.exp(s)
    p = p * pl.reciprocal(jnp.sum(p, axis=-1, keepdims=True), approx=True)
    ctx_h = jnp.einsum('hqk,hkd->hqd', p, v,
                       preferred_element_type=jnp.float32)              # [nh,S,hd]

    # Merge heads by writing each head's context into an [S, H] VMEM scratch
    # (no jnp.concatenate relayout).
    for h in range(nh):
        ctx_scr[:, h * hd:(h + 1) * hd] = ctx_h[h]
    ctx = ctx_scr[...]

    # residual + LayerNorm1
    attn_out = _layernorm(ctx + x, g1_ref[0], b1_ref[0])

    # FFN: intermediate -> exact (erf) GELU -> output
    inter = jnp.dot(attn_out, wi_ref[0], preferred_element_type=jnp.float32) + bi_ref[0]
    inter = _gelu_exact(inter)
    out = jnp.dot(inter, wo_ref[0], preferred_element_type=jnp.float32) + bo_ref[0]

    # residual + LayerNorm2 -> carry in the resident hidden block
    hidden_ref[0] = _layernorm(out + attn_out, g2_ref[0],
                               b2_ref[0]).astype(hidden_ref.dtype)


# ---------------------------------------------------------------------------
# Tiny epilogue kernel: pooler + classifier on the CLS rows.
# ---------------------------------------------------------------------------
def pooler_classifier_kernel(cls_ref, wp_ref, bp_ref, wc_ref, bc_ref, logits_ref):
    pooled = jnp.dot(cls_ref[...], wp_ref[...],
                     preferred_element_type=jnp.float32) + bp_ref[...]
    # NOTE: JarvisModel's pooler is a plain nn.Linear (no tanh) -- matched here.
    logits_ref[...] = (jnp.dot(pooled, wc_ref[...],
                               preferred_element_type=jnp.float32)
                       + bc_ref[...]).astype(logits_ref.dtype)


# ---------------------------------------------------------------------------
# Wrapper: JAX glue (embedding gather, weight pre-permutation) + pallas_calls
# ---------------------------------------------------------------------------
def jarvis_forward(params, input_ids, attention_mask, num_heads):
    B, S = input_ids.shape
    H = params["emb"].shape[1]
    L = params["w_qkv"].shape[0]
    I = params["w_i"].shape[2]
    C = params["wc"].shape[1]
    nh = num_heads
    hd = H // nh
    scale = 1.0 / math.sqrt(hd)

    # TODO(synk): token/position embedding gathers are data-dependent lookups;
    # kept in plain JAX glue (a Pallas DMA gather is not worth it at this size).
    emb = jnp.take(params["emb"], input_ids, axis=0)            # [B, S, H]
    x_emb = emb + params["pos"][:S][None, :, :]                 # [B, S, H]

    # Thin mask row per batch; the additive bias is built inside the kernel.
    mask3 = attention_mask.astype(jnp.float32).reshape(B, 1, S)

    # ---- one-time weight preprocessing ------------------------------------
    # Head-stack the fused QKV weights to [L, nh, H, 3*hd] (each head's q|k|v
    # block contiguous) and fold 1/sqrt(hd) into the Q columns + bias.
    wq, wk, wv = jnp.split(params["w_qkv"], 3, axis=-1)         # [L, H, H] each
    bq, bk, bv = jnp.split(params["b_qkv"], 3, axis=-1)         # [L, 1, H] each

    def stack_w(w):   # [L, H, H] -> [L, nh, H, hd]
        return w.reshape(L, H, nh, hd).transpose(0, 2, 1, 3)

    def stack_b(b):   # [L, 1, H] -> [L, nh, 1, hd]
        return b.reshape(L, 1, nh, hd).transpose(0, 2, 1, 3)

    wqkv_h = jnp.concatenate([stack_w(wq) * scale, stack_w(wk), stack_w(wv)],
                             axis=-1)                           # [L, nh, H, 3hd]
    bqkv_h = jnp.concatenate([stack_b(bq) * scale, stack_b(bk), stack_b(bv)],
                             axis=-1)                           # [L, nh, 1, 3hd]

    # Lane-dense logits: pad classifier columns to a multiple of 128.
    C_PAD = max(128, ((C + 127) // 128) * 128)
    wc_pad = jnp.zeros((H, C_PAD), jnp.float32).at[:, :C].set(params["wc"])
    bc_pad = jnp.zeros((1, C_PAD), jnp.float32).at[:, :C].set(params["bc"])

    # ---- BlockSpec helpers --------------------------------------------------
    def per_batch(shape):
        nd = len(shape)
        return pl.BlockSpec((1,) + shape, lambda b, l, _nd=nd: (b,) + (0,) * _nd)

    def per_layer(shape):
        nd = len(shape)
        return pl.BlockSpec((1,) + shape, lambda b, l, _nd=nd: (l,) + (0,) * _nd)

    def const(shape):
        nd = len(shape)
        return pl.BlockSpec(shape, lambda b, l, _nd=nd: (0,) * _nd)

    in_specs = [
        per_batch((S, H)),                  # summed embeddings
        per_batch((1, S)),                  # attention mask row
        const((1, H)), const((1, H)),       # embedding LN gamma/beta
        per_layer((nh, H, 3 * hd)),         # head-stacked fused QKV weight
        per_layer((nh, 1, 3 * hd)),         # head-stacked fused QKV bias
        per_layer((H, I)), per_layer((1, I)),    # intermediate
        per_layer((I, H)), per_layer((1, H)),    # output
        per_layer((1, H)), per_layer((1, H)),    # ln1
        per_layer((1, H)), per_layer((1, H)),    # ln2
    ]
    out_specs = pl.BlockSpec((1, S, H), lambda b, l: (b, 0, 0))  # resident per batch

    hidden = pl.pallas_call(
        functools.partial(encoder_kernel, num_heads=nh, head_dim=hd),
        out_shape=jax.ShapeDtypeStruct((B, S, H), jnp.float32),
        grid=(B, L),                        # batch parallel, layers sequential
        in_specs=in_specs,
        out_specs=out_specs,
        scratch_shapes=[pltpu.VMEM((S, H), jnp.float32)],
        compiler_params=pltpu.CompilerParams(
            dimension_semantics=("parallel", "arbitrary")),
    )(x_emb, mask3, params["ln_g"], params["ln_b"], wqkv_h, bqkv_h,
      params["w_i"], params["b_i"], params["w_o"], params["b_o"],
      params["g1"], params["b1"], params["g2"], params["b2"])

    # CLS rows are a static slice (no one-hot selection matmul).
    cls = hidden[:, 0, :]                                        # [B, H]

    logits_pad = pl.pallas_call(
        pooler_classifier_kernel,
        out_shape=jax.ShapeDtypeStruct((B, C_PAD), jnp.float32),
    )(cls, params["wp"], params["bp"], wc_pad, bc_pad)
    logits = logits_pad[:, :C]

    return logits, hidden


# ---------------------------------------------------------------------------
# Parameters (stacked over layers, fused QKV columns) and a pure-JAX reference
# ---------------------------------------------------------------------------
def init_params(key, *, vocab_size, hidden_size, num_heads, intermediate_size,
                num_layers, max_position_embeddings, num_categories):
    H, I, L, C = hidden_size, intermediate_size, num_layers, num_categories
    ks = iter(jax.random.split(key, 24))

    def nrm(shape, std=0.02):
        return jax.random.normal(next(ks), shape, jnp.float32) * std

    return {
        "emb": nrm((vocab_size, H)),
        "pos": nrm((max_position_embeddings, H)),
        "ln_g": 1.0 + nrm((1, H)), "ln_b": nrm((1, H)),
        "wp": nrm((H, H)), "bp": nrm((1, H)),
        "wc": nrm((H, C)), "bc": nrm((1, C)),
        "w_qkv": nrm((L, H, 3 * H)), "b_qkv": nrm((L, 1, 3 * H)),
        "w_i": nrm((L, H, I)), "b_i": nrm((L, 1, I)),
        "w_o": nrm((L, I, H)), "b_o": nrm((L, 1, H)),
        "g1": 1.0 + nrm((L, 1, H)), "b1": nrm((L, 1, H)),
        "g2": 1.0 + nrm((L, 1, H)), "b2": nrm((L, 1, H)),
    }


def jarvis_reference(params, input_ids, attention_mask, num_heads):
    """Pure-JAX forward mirroring the PyTorch JarvisModel semantics."""
    B, S = input_ids.shape
    H = params["emb"].shape[1]
    hd = H // num_heads

    def ln(x, g, b):
        mu = jnp.mean(x, -1, keepdims=True)
        var = jnp.mean((x - mu) ** 2, -1, keepdims=True)
        return (x - mu) / jnp.sqrt(var + LN_EPS) * g + b

    h = jnp.take(params["emb"], input_ids, axis=0) + params["pos"][:S][None]
    h = ln(h, params["ln_g"], params["ln_b"])
    ext = ((1.0 - attention_mask.astype(jnp.float32)) * -10000.0)[:, None, None, :]

    for l in range(params["w_qkv"].shape[0]):
        x = h
        qkv = x @ params["w_qkv"][l] + params["b_qkv"][l]
        q, k, v = jnp.split(qkv, 3, axis=-1)
        to_heads = lambda t: t.reshape(B, S, num_heads, hd).transpose(0, 2, 1, 3)
        qh, kh, vh = to_heads(q), to_heads(k), to_heads(v)
        scores = qh @ kh.transpose(0, 1, 3, 2) / jnp.sqrt(jnp.float32(hd)) + ext
        probs = jax.nn.softmax(scores, axis=-1)
        ctx = (probs @ vh).transpose(0, 2, 1, 3).reshape(B, S, H)
        attn_out = ln(ctx + x, params["g1"][l, 0], params["b1"][l, 0])
        inter = jax.nn.gelu(attn_out @ params["w_i"][l] + params["b_i"][l],
                            approximate=False)
        out = inter @ params["w_o"][l] + params["b_o"][l]
        h = ln(out + attn_out, params["g2"][l, 0], params["b2"][l, 0])

    pooled = h[:, 0] @ params["wp"] + params["bp"]
    logits = pooled @ params["wc"] + params["bc"]
    return logits, h


if __name__ == "__main__":
    VOCAB, HIDDEN, HEADS, INTER = 50, 32, 4, 64
    LAYERS, MAX_POS, CATEGORIES = 2, 16, 3
    B, S = 2, 8

    key = jax.random.PRNGKey(0)
    k_param, k_ids = jax.random.split(key)

    params = init_params(
        k_param, vocab_size=VOCAB, hidden_size=HIDDEN, num_heads=HEADS,
        intermediate_size=INTER, num_layers=LAYERS,
        max_position_embeddings=MAX_POS, num_categories=CATEGORIES)

    input_ids = jax.random.randint(k_ids, (B, S), 0, VOCAB, dtype=jnp.int32)
    attention_mask = jnp.ones((B, S), jnp.float32).at[1, 6:].set(0.0)

    fwd = jax.jit(functools.partial(jarvis_forward, num_heads=HEADS))
    logits, hidden = fwd(params, input_ids, attention_mask)
    jax.block_until_ready((logits, hidden))

    ref_logits, ref_hidden = jarvis_reference(params, input_ids, attention_mask, HEADS)

    assert logits.shape == (B, CATEGORIES)
    assert hidden.shape == (B, S, HIDDEN)
    assert jnp.allclose(logits, ref_logits, atol=1e-2, rtol=1e-2), "logits mismatch"
    assert jnp.allclose(hidden, ref_hidden, atol=1e-2, rtol=1e-2), "hidden mismatch"
    print("KERNEL_OK")
</pallas_src>

<mosaic_0001>
module attributes {stable_mosaic.version = 11 : i64} {
  func.func @encoder_kernel(%arg0: i32, %arg1: i32, %arg2: memref<1x8x32xf32, #tpu.memory_space<vmem>>, %arg3: memref<1x1x8xf32, #tpu.memory_space<vmem>>, %arg4: memref<1x32xf32, #tpu.memory_space<vmem>>, %arg5: memref<1x32xf32, #tpu.memory_space<vmem>>, %arg6: memref<1x4x32x24xf32, #tpu.memory_space<vmem>>, %arg7: memref<1x4x1x24xf32, #tpu.memory_space<vmem>>, %arg8: memref<1x32x64xf32, #tpu.memory_space<vmem>>, %arg9: memref<1x1x64xf32, #tpu.memory_space<vmem>>, %arg10: memref<1x64x32xf32, #tpu.memory_space<vmem>>, %arg11: memref<1x1x32xf32, #tpu.memory_space<vmem>>, %arg12: memref<1x1x32xf32, #tpu.memory_space<vmem>>, %arg13: memref<1x1x32xf32, #tpu.memory_space<vmem>>, %arg14: memref<1x1x32xf32, #tpu.memory_space<vmem>>, %arg15: memref<1x1x32xf32, #tpu.memory_space<vmem>>, %arg16: memref<1x8x32xf32, #tpu.memory_space<vmem>>, %arg17: memref<8x32xf32, #tpu.memory_space<vmem>>) attributes {dimension_semantics = [#tpu.dimension_semantics<parallel>, #tpu.dimension_semantics<arbitrary>], iteration_bounds = array<i64: 2, 2>, scalar_prefetch = 0 : i64, scratch_operands = 1 : i64, tpu.core_type = #tpu.core_type<tc>, window_params = [{transform_indices = @transform_0, window_bounds = array<i64: 1, 8, 32>}, {transform_indices = @transform_1, window_bounds = array<i64: 1, 1, 8>}, {pipeline_mode = #tpu.pipeline_mode<synchronous>, transform_indices = @transform_2, window_bounds = array<i64: 1, 32>}, {pipeline_mode = #tpu.pipeline_mode<synchronous>, transform_indices = @transform_3, window_bounds = array<i64: 1, 32>}, {transform_indices = @transform_4, window_bounds = array<i64: 1, 4, 32, 24>}, {transform_indices = @transform_5, window_bounds = array<i64: 1, 4, 1, 24>}, {transform_indices = @transform_6, window_bounds = array<i64: 1, 32, 64>}, {transform_indices = @transform_7, window_bounds = array<i64: 1, 1, 64>}, {transform_indices = @transform_8, window_bounds = array<i64: 1, 64, 32>}, {transform_indices = @transform_9, window_bounds = array<i64: 1, 1, 32>}, {transform_indices = @transform_10, window_bounds = array<i64: 1, 1, 32>}, {transform_indices = @transform_11, window_bounds = array<i64: 1, 1, 32>}, {transform_indices = @transform_12, window_bounds = array<i64: 1, 1, 32>}, {transform_indices = @transform_13, window_bounds = array<i64: 1, 1, 32>}, {transform_indices = @transform_14, window_bounds = array<i64: 1, 8, 32>}]} {
    %c0_i32 = arith.constant 0 : i32
    %0 = arith.cmpi eq, %arg1, %c0_i32 : i32
    %1 = arith.extui %0 : i1 to i32
    %c0_i32_0 = arith.constant 0 : i32
    %2 = arith.cmpi ne, %1, %c0_i32_0 : i32
    scf.if %2 {
      %c0_81 = arith.constant 0 : index
      %c0_82 = arith.constant 0 : index
      %c0_83 = arith.constant 0 : index
      %160 = vector.load %arg2[%c0_81, %c0_82, %c0_83] : memref<1x8x32xf32, #tpu.memory_space<vmem>>, vector<1x8x32xf32>
      %161 = vector.shape_cast %160 : vector<1x8x32xf32> to vector<8x32xf32>
      %c0_84 = arith.constant 0 : index
      %c0_85 = arith.constant 0 : index
      %162 = vector.load %arg4[%c0_84, %c0_85] : memref<1x32xf32, #tpu.memory_space<vmem>>, vector<1x32xf32>
      %c0_86 = arith.constant 0 : index
      %c0_87 = arith.constant 0 : index
      %163 = vector.load %arg5[%c0_86, %c0_87] : memref<1x32xf32, #tpu.memory_space<vmem>>, vector<1x32xf32>
      %cst_88 = arith.constant dense<0.000000e+00> : vector<8xf32>
      %164 = vector.multi_reduction <add>, %161, %cst_88 [1] : vector<8x32xf32> to vector<8xf32>
      %165 = vector.shape_cast %164 : vector<8xf32> to vector<8x1xf32>
      %cst_89 = arith.constant 3.200000e+01 : f32
      %166 = vector.broadcast %cst_89 : f32 to vector<8x1xf32>
      %167 = arith.divf %165, %166 : vector<8x1xf32>
      %168 = vector.broadcast %167 : vector<8x1xf32> to vector<8x32xf32>
      %169 = arith.subf %161, %168 : vector<8x32xf32>
      %170 = arith.mulf %169, %169 : vector<8x32xf32>
      %cst_90 = arith.constant dense<0.000000e+00> : vector<8xf32>
      %171 = vector.multi_reduction <add>, %170, %cst_90 [1] : vector<8x32xf32> to vector<8xf32>
      %172 = vector.shape_cast %171 : vector<8xf32> to vector<8x1xf32>
      %cst_91 = arith.constant 3.200000e+01 : f32
      %173 = vector.broadcast %cst_91 : f32 to vector<8x1xf32>
      %174 = arith.divf %172, %173 : vector<8x1xf32>
      %175 = vector.broadcast %167 : vector<8x1xf32> to vector<8x32xf32>
      %176 = arith.subf %161, %175 : vector<8x32xf32>
      %cst_92 = arith.constant 9.99999974E-6 : f32
      %177 = vector.broadcast %cst_92 : f32 to vector<8x1xf32>
      %178 = arith.addf %174, %177 : vector<8x1xf32>
      %179 = math.rsqrt %178 : vector<8x1xf32>
      %180 = vector.broadcast %179 : vector<8x1xf32> to vector<8x32xf32>
      %181 = arith.mulf %176, %180 : vector<8x32xf32>
      %182 = vector.broadcast %162 : vector<1x32xf32> to vector<8x32xf32>
      %183 = arith.mulf %181, %182 : vector<8x32xf32>
      %184 = vector.broadcast %163 : vector<1x32xf32> to vector<8x32xf32>
      %185 = arith.addf %183, %184 : vector<8x32xf32>
      %c0_93 = arith.constant 0 : index
      %c0_94 = arith.constant 0 : index
      %c0_95 = arith.constant 0 : index
      %186 = vector.load %arg16[%c0_93, %c0_94, %c0_95] : memref<1x8x32xf32, #tpu.memory_space<vmem>>, vector<1x8x32xf32>
      %187 = vector.shape_cast %186 : vector<1x8x32xf32> to vector<8x32xf32>
      %188 = vector.shape_cast %185 : vector<8x32xf32> to vector<1x8x32xf32>
      tpu.vector_store %arg16[%c0_93, %c0_94, %c0_95], %188 {strides = array<i32>} : memref<1x8x32xf32, #tpu.memory_space<vmem>>, vector<1x8x32xf32>,
    } else {
    }
    %c0 = arith.constant 0 : index
    %c0_1 = arith.constant 0 : index
    %c0_2 = arith.constant 0 : index
    %3 = vector.load %arg16[%c0, %c0_1, %c0_2] : memref<1x8x32xf32, #tpu.memory_space<vmem>>, vector<1x8x32xf32>
    %4 = vector.shape_cast %3 : vector<1x8x32xf32> to vector<8x32xf32>
    %c0_3 = arith.constant 0 : index
    %c0_4 = arith.constant 0 : index
    %c0_5 = arith.constant 0 : index
    %5 = vector.load %arg3[%c0_3, %c0_4, %c0_5] : memref<1x1x8xf32, #tpu.memory_space<vmem>>, vector<1x1x8xf32>
    %cst = arith.constant 1.000000e+00 : f32
    %6 = vector.broadcast %cst : f32 to vector<1x1x8xf32>
    %7 = arith.subf %6, %5 : vector<1x1x8xf32>
    %cst_6 = arith.constant -1.000000e+04 : f32
    %8 = vector.broadcast %cst_6 : f32 to vector<1x1x8xf32>
    %9 = arith.mulf %7, %8 : vector<1x1x8xf32>
    %10 = vector.shape_cast %4 : vector<8x32xf32> to vector<1x8x32xf32>
    %11 = vector.broadcast %10 : vector<1x8x32xf32> to vector<4x8x32xf32>
    %c0_7 = arith.constant 0 : index
    %c0_8 = arith.constant 0 : index
    %c0_9 = arith.constant 0 : index
    %c0_10 = arith.constant 0 : index
    %12 = vector.load %arg6[%c0_7, %c0_8, %c0_9, %c0_10] : memref<1x4x32x24xf32, #tpu.memory_space<vmem>>, vector<1x4x32x24xf32>
    %13 = vector.shape_cast %12 : vector<1x4x32x24xf32> to vector<4x32x24xf32>
    "tpu.trace_start"() <{level = 10 : i32, message = "hsd,hdk->hsk"}> : () -> ()
    %cst_11 = arith.constant dense<0.000000e+00> : vector<4x8x24xf32>
    %14 = tpu.matmul %11, %13, %cst_11 {dimension_numbers = #tpu.dot_dimension_numbers<[2], [1], [1], [2], [0, 0, 0, 1, 1, 2], [0], [0]>} : vector<4x8x32xf32>, vector<4x32x24xf32>, vector<4x8x24xf32> -> vector<4x8x24xf32>
    "tpu.trace_stop"() : () -> ()
    %c0_12 = arith.constant 0 : index
    %c0_13 = arith.constant 0 : index
    %c0_14 = arith.constant 0 : index
    %c0_15 = arith.constant 0 : index
    %15 = vector.load %arg7[%c0_12, %c0_13, %c0_14, %c0_15] : memref<1x4x1x24xf32, #tpu.memory_space<vmem>>, vector<1x4x1x24xf32>
    %16 = vector.shape_cast %15 : vector<1x4x1x24xf32> to vector<4x1x24xf32>
    %17 = vector.broadcast %16 : vector<4x1x24xf32> to vector<4x8x24xf32>
    %18 = arith.addf %14, %17 : vector<4x8x24xf32>
    %19 = vector.extract_strided_slice %18 {offsets = [0, 0, 0], sizes = [4, 8, 8], strides = [1, 1, 1]} : vector<4x8x24xf32> to vector<4x8x8xf32>
    %20 = vector.extract_strided_slice %18 {offsets = [0, 0, 8], sizes = [4, 8, 8], strides = [1, 1, 1]} : vector<4x8x24xf32> to vector<4x8x8xf32>
    %21 = vector.extract_strided_slice %18 {offsets = [0, 0, 16], sizes = [4, 8, 8], strides = [1, 1, 1]} : vector<4x8x24xf32> to vector<4x8x8xf32>
    "tpu.trace_start"() <{level = 10 : i32, message = "hqd,hkd->hqk"}> : () -> ()
    %cst_16 = arith.constant dense<0.000000e+00> : vector<4x8x8xf32>
    %22 = tpu.matmul %19, %20, %cst_16 {dimension_numbers = #tpu.dot_dimension_numbers<[2], [2], [1], [1], [0, 0, 0, 1, 1, 1], [0], [0]>} : vector<4x8x8xf32>, vector<4x8x8xf32>, vector<4x8x8xf32> -> vector<4x8x8xf32>
    "tpu.trace_stop"() : () -> ()
    %23 = vector.broadcast %9 : vector<1x1x8xf32> to vector<4x8x8xf32>
    %24 = arith.addf %22, %23 : vector<4x8x8xf32>
    %cst_17 = arith.constant dense<0xFF800000> : vector<4x8xf32>
    %25 = vector.multi_reduction <maximumf>, %24, %cst_17 [2] : vector<4x8x8xf32> to vector<4x8xf32>
    %26 = vector.shape_cast %25 : vector<4x8xf32> to vector<4x8x1xf32>
    %27 = vector.broadcast %26 : vector<4x8x1xf32> to vector<4x8x8xf32>
    %28 = arith.subf %24, %27 : vector<4x8x8xf32>
    %29 = math.exp %28 : vector<4x8x8xf32>
    %cst_18 = arith.constant dense<0.000000e+00> : vector<4x8xf32>
    %30 = vector.multi_reduction <add>, %29, %cst_18 [2] : vector<4x8x8xf32> to vector<4x8xf32>
    %31 = vector.shape_cast %30 : vector<4x8xf32> to vector<4x8x1xf32>
    %32 = tpu.reciprocal %31 {approx = true} : vector<4x8x1xf32> -> vector<4x8x1xf32>
    %33 = vector.broadcast %32 : vector<4x8x1xf32> to vector<4x8x8xf32>
    %34 = arith.mulf %29, %33 : vector<4x8x8xf32>
    "tpu.trace_start"() <{level = 10 : i32, message = "hqk,hkd->hqd"}> : () -> ()
    %cst_19 = arith.constant dense<0.000000e+00> : vector<4x8x8xf32>
    %35 = tpu.matmul %34, %21, %cst_19 {dimension_numbers = #tpu.dot_dimension_numbers<[2], [1], [1], [2], [0, 0, 0, 1, 1, 2], [0], [0]>} : vector<4x8x8xf32>, vector<4x8x8xf32>, vector<4x8x8xf32> -> vector<4x8x8xf32>
    "tpu.trace_stop"() : () -> ()
    %36 = vector.extract_strided_slice %35 {offsets = [0, 0, 0], sizes = [1, 8, 8], strides = [1, 1, 1]} : vector<4x8x8xf32> to vector<1x8x8xf32>
    %37 = vector.shape_cast %36 : vector<1x8x8xf32> to vector<8x8xf32>
    %c0_20 = arith.constant 0 : index
    %c0_21 = arith.constant 0 : index
    %38 = vector.load %arg17[%c0_20, %c0_21] : memref<8x32xf32, #tpu.memory_space<vmem>>, vector<8x8xf32>
    tpu.vector_store %arg17[%c0_20, %c0_21], %37 {strides = array<i32>} : memref<8x32xf32, #tpu.memory_space<vmem>>, vector<8x8xf32>,
    %39 = vector.extract_strided_slice %35 {offsets = [1, 0, 0], sizes = [1, 8, 8], strides = [1, 1, 1]} : vector<4x8x8xf32> to vector<1x8x8xf32>
    %40 = vector.shape_cast %39 : vector<1x8x8xf32> to vector<8x8xf32>
    %c0_22 = arith.constant 0 : index
    %c8 = arith.constant 8 : index
    %41 = vector.load %arg17[%c0_22, %c8] : memref<8x32xf32, #tpu.memory_space<vmem>>, vector<8x8xf32>
    tpu.vector_store %arg17[%c0_22, %c8], %40 {strides = array<i32>} : memref<8x32xf32, #tpu.memory_space<vmem>>, vector<8x8xf32>,
    %42 = vector.extract_strided_slice %35 {offsets = [2, 0, 0], sizes = [1, 8, 8], strides = [1, 1, 1]} : vector<4x8x8xf32> to vector<1x8x8xf32>
    %43 = vector.shape_cast %42 : vector<1x8x8xf32> to vector<8x8xf32>
    %c0_23 = arith.constant 0 : index
    %c16 = arith.constant 16 : index
    %44 = vector.load %arg17[%c0_23, %c16] : memref<8x32xf32, #tpu.memory_space<vmem>>, vector<8x8xf32>
    tpu.vector_store %arg17[%c0_23, %c16], %43 {strides = array<i32>} : memref<8x32xf32, #tpu.memory_space<vmem>>, vector<8x8xf32>,
    %45 = vector.extract_strided_slice %35 {offsets = [3, 0, 0], sizes = [1, 8, 8], strides = [1, 1, 1]} : vector<4x8x8xf32> to vector<1x8x8xf32>
    %46 = vector.shape_cast %45 : vector<1x8x8xf32> to vector<8x8xf32>
    %c0_24 = arith.constant 0 : index
    %c24 = arith.constant 24 : index
    %47 = vector.load %arg17[%c0_24, %c24] : memref<8x32xf32, #tpu.memory_space<vmem>>, vector<8x8xf32>
    tpu.vector_store %arg17[%c0_24, %c24], %46 {strides = array<i32>} : memref<8x32xf32, #tpu.memory_space<vmem>>, vector<8x8xf32>,
    %c0_25 = arith.constant 0 : index
    %c0_26 = arith.constant 0 : index
    %48 = vector.load %arg17[%c0_25, %c0_26] : memref<8x32xf32, #tpu.memory_space<vmem>>, vector<8x32xf32>
    %49 = arith.addf %48, %4 : vector<8x32xf32>
    %c0_27 = arith.constant 0 : index
    %c0_28 = arith.constant 0 : index
    %c0_29 = arith.constant 0 : index
    %50 = vector.load %arg12[%c0_27, %c0_28, %c0_29] : memref<1x1x32xf32, #tpu.memory_space<vmem>>, vector<1x1x32xf32>
    %51 = vector.shape_cast %50 : vector<1x1x32xf32> to vector<1x32xf32>
    %c0_30 = arith.constant 0 : index
    %c0_31 = arith.constant 0 : index
    %c0_32 = arith.constant 0 : index
    %52 = vector.load %arg13[%c0_30, %c0_31, %c0_32] : memref<1x1x32xf32, #tpu.memory_space<vmem>>, vector<1x1x32xf32>
    %53 = vector.shape_cast %52 : vector<1x1x32xf32> to vector<1x32xf32>
    %cst_33 = arith.constant dense<0.000000e+00> : vector<8xf32>
    %54 = vector.multi_reduction <add>, %49, %cst_33 [1] : vector<8x32xf32> to vector<8xf32>
    %55 = vector.shape_cast %54 : vector<8xf32> to vector<8x1xf32>
    %cst_34 = arith.constant 3.200000e+01 : f32
    %56 = vector.broadcast %cst_34 : f32 to vector<8x1xf32>
    %57 = arith.divf %55, %56 : vector<8x1xf32>
    %58 = vector.broadcast %57 : vector<8x1xf32> to vector<8x32xf32>
    %59 = arith.subf %49, %58 : vector<8x32xf32>
    %60 = arith.mulf %59, %59 : vector<8x32xf32>
    %cst_35 = arith.constant dense<0.000000e+00> : vector<8xf32>
    %61 = vector.multi_reduction <add>, %60, %cst_35 [1] : vector<8x32xf32> to vector<8xf32>
    %62 = vector.shape_cast %61 : vector<8xf32> to vector<8x1xf32>
    %cst_36 = arith.constant 3.200000e+01 : f32
    %63 = vector.broadcast %cst_36 : f32 to vector<8x1xf32>
    %64 = arith.divf %62, %63 : vector<8x1xf32>
    %65 = vector.broadcast %57 : vector<8x1xf32> to vector<8x32xf32>
    %66 = arith.subf %49, %65 : vector<8x32xf32>
    %cst_37 = arith.constant 9.99999974E-6 : f32
    %67 = vector.broadcast %cst_37 : f32 to vector<8x1xf32>
    %68 = arith.addf %64, %67 : vector<8x1xf32>
    %69 = math.rsqrt %68 : vector<8x1xf32>
    %70 = vector.broadcast %69 : vector<8x1xf32> to vector<8x32xf32>
    %71 = arith.mulf %66, %70 : vector<8x32xf32>
    %72 = vector.broadcast %51 : vector<1x32xf32> to vector<8x32xf32>
    %73 = arith.mulf %71, %72 : vector<8x32xf32>
    %74 = vector.broadcast %53 : vector<1x32xf32> to vector<8x32xf32>
    %75 = arith.addf %73, %74 : vector<8x32xf32>
    %c0_38 = arith.constant 0 : index
    %c0_39 = arith.constant 0 : index
    %c0_40 = arith.constant 0 : index
    %76 = vector.load %arg8[%c0_38, %c0_39, %c0_40] : memref<1x32x64xf32, #tpu.memory_space<vmem>>, vector<1x32x64xf32>
    %77 = vector.shape_cast %76 : vector<1x32x64xf32> to vector<32x64xf32>
    %cst_41 = arith.constant dense<0.000000e+00> : vector<8x64xf32>
    %78 = tpu.matmul %75, %77, %cst_41 {dimension_numbers = #tpu.dot_dimension_numbers<[1], [0], [0], [1], [0, 0, 1, 1], [], []>} : vector<8x32xf32>, vector<32x64xf32>, vector<8x64xf32> -> vector<8x64xf32>
    %c0_42 = arith.constant 0 : index
    %c0_43 = arith.constant 0 : index
    %c0_44 = arith.constant 0 : index
    %79 = vector.load %arg9[%c0_42, %c0_43, %c0_44] : memref<1x1x64xf32, #tpu.memory_space<vmem>>, vector<1x1x64xf32>
    %80 = vector.shape_cast %79 : vector<1x1x64xf32> to vector<1x64xf32>
    %81 = vector.broadcast %80 : vector<1x64xf32> to vector<8x64xf32>
    %82 = arith.addf %78, %81 : vector<8x64xf32>
    %cst_45 = arith.constant 5.000000e-01 : f32
    %83 = vector.broadcast %cst_45 : f32 to vector<8x64xf32>
    %84 = arith.mulf %82, %83 : vector<8x64xf32>
    %cst_46 = arith.constant 0.707106769 : f32
    %85 = vector.broadcast %cst_46 : f32 to vector<8x64xf32>
    %86 = arith.mulf %82, %85 : vector<8x64xf32>
    %87 = math.absf %86 : vector<8x64xf32>
    %cst_47 = arith.constant 0.327591091 : f32
    %88 = vector.broadcast %cst_47 : f32 to vector<8x64xf32>
    %89 = arith.mulf %88, %87 : vector<8x64xf32>
    %cst_48 = arith.constant 1.000000e+00 : f32
    %90 = vector.broadcast %cst_48 : f32 to vector<8x64xf32>
    %91 = arith.addf %90, %89 : vector<8x64xf32>
    %cst_49 = arith.constant 1.000000e+00 : f32
    %92 = vector.broadcast %cst_49 : f32 to vector<8x64xf32>
    %93 = arith.divf %92, %91 : vector<8x64xf32>
    %cst_50 = arith.constant 1.06140542 : f32
    %94 = vector.broadcast %cst_50 : f32 to vector<8x64xf32>
    %95 = arith.mulf %94, %93 : vector<8x64xf32>
    %cst_51 = arith.constant -1.45315206 : f32
    %96 = vector.broadcast %cst_51 : f32 to vector<8x64xf32>
    %97 = arith.addf %95, %96 : vector<8x64xf32>
    %98 = arith.mulf %97, %93 : vector<8x64xf32>
    %cst_52 = arith.constant 1.42141378 : f32
    %99 = vector.broadcast %cst_52 : f32 to vector<8x64xf32>
    %100 = arith.addf %98, %99 : vector<8x64xf32>
    %101 = arith.mulf %100, %93 : vector<8x64xf32>
    %cst_53 = arith.constant -0.284496725 : f32
    %102 = vector.broadcast %cst_53 : f32 to vector<8x64xf32>
    %103 = arith.addf %101, %102 : vector<8x64xf32>
    %104 = arith.mulf %103, %93 : vector<8x64xf32>
    %cst_54 = arith.constant 0.254829586 : f32
    %105 = vector.broadcast %cst_54 : f32 to vector<8x64xf32>
    %106 = arith.addf %104, %105 : vector<8x64xf32>
    %107 = arith.mulf %106, %93 : vector<8x64xf32>
    %cst_55 = arith.constant 0.000000e+00 : f32
    %108 = vector.broadcast %cst_55 : f32 to vector<8x64xf32>
    %109 = arith.subf %108, %87 : vector<8x64xf32>
    %110 = arith.mulf %109, %87 : vector<8x64xf32>
    %111 = math.exp %110 : vector<8x64xf32>
    %112 = arith.mulf %107, %111 : vector<8x64xf32>
    %cst_56 = arith.constant 1.000000e+00 : f32
    %113 = vector.broadcast %cst_56 : f32 to vector<8x64xf32>
    %114 = arith.subf %113, %112 : vector<8x64xf32>
    %cst_57 = arith.constant 0.000000e+00 : f32
    %115 = vector.broadcast %cst_57 : f32 to vector<8x64xf32>
    %116 = arith.cmpf olt, %86, %115 : vector<8x64xf32>
    %cst_58 = arith.constant 0.000000e+00 : f32
    %117 = vector.broadcast %cst_58 : f32 to vector<8x64xf32>
    %118 = arith.subf %117, %114 : vector<8x64xf32>
    %119 = arith.select %116, %118, %114 : vector<8x64xi1>, vector<8x64xf32>
    %cst_59 = arith.constant 1.000000e+00 : f32
    %120 = vector.broadcast %cst_59 : f32 to vector<8x64xf32>
    %121 = arith.addf %120, %119 : vector<8x64xf32>
    %122 = arith.mulf %84, %121 : vector<8x64xf32>
    %c0_60 = arith.constant 0 : index
    %c0_61 = arith.constant 0 : index
    %c0_62 = arith.constant 0 : index
    %123 = vector.load %arg10[%c0_60, %c0_61, %c0_62] : memref<1x64x32xf32, #tpu.memory_space<vmem>>, vector<1x64x32xf32>
    %124 = vector.shape_cast %123 : vector<1x64x32xf32> to vector<64x32xf32>
    %cst_63 = arith.constant dense<0.000000e+00> : vector<8x32xf32>
    %125 = tpu.matmul %122, %124, %cst_63 {dimension_numbers = #tpu.dot_dimension_numbers<[1], [0], [0], [1], [0, 0, 1, 1], [], []>} : vector<8x64xf32>, vector<64x32xf32>, vector<8x32xf32> -> vector<8x32xf32>
    %c0_64 = arith.constant 0 : index
    %c0_65 = arith.constant 0 : index
    %c0_66 = arith.constant 0 : index
    %126 = vector.load %arg11[%c0_64, %c0_65, %c0_66] : memref<1x1x32xf32, #tpu.memory_space<vmem>>, vector<1x1x32xf32>
    %127 = vector.shape_cast %126 : vector<1x1x32xf32> to vector<1x32xf32>
    %128 = vector.broadcast %127 : vector<1x32xf32> to vector<8x32xf32>
    %129 = arith.addf %125, %128 : vector<8x32xf32>
    %130 = arith.addf %129, %75 : vector<8x32xf32>
    %c0_67 = arith.constant 0 : index
    %c0_68 = arith.constant 0 : index
    %c0_69 = arith.constant 0 : index
    %131 = vector.load %arg14[%c0_67, %c0_68, %c0_69] : memref<1x1x32xf32, #tpu.memory_space<vmem>>, vector<1x1x32xf32>
    %132 = vector.shape_cast %131 : vector<1x1x32xf32> to vector<1x32xf32>
    %c0_70 = arith.constant 0 : index
    %c0_71 = arith.constant 0 : index
    %c0_72 = arith.constant 0 : index
    %133 = vector.load %arg15[%c0_70, %c0_71, %c0_72] : memref<1x1x32xf32, #tpu.memory_space<vmem>>, vector<1x1x32xf32>
    %134 = vector.shape_cast %133 : vector<1x1x32xf32> to vector<1x32xf32>
    %cst_73 = arith.constant dense<0.000000e+00> : vector<8xf32>
    %135 = vector.multi_reduction <add>, %130, %cst_73 [1] : vector<8x32xf32> to vector<8xf32>
    %136 = vector.shape_cast %135 : vector<8xf32> to vector<8x1xf32>
    %cst_74 = arith.constant 3.200000e+01 : f32
    %137 = vector.broadcast %cst_74 : f32 to vector<8x1xf32>
    %138 = arith.divf %136, %137 : vector<8x1xf32>
    %139 = vector.broadcast %138 : vector<8x1xf32> to vector<8x32xf32>
    %140 = arith.subf %130, %139 : vector<8x32xf32>
    %141 = arith.mulf %140, %140 : vector<8x32xf32>
    %cst_75 = arith.constant dense<0.000000e+00> : vector<8xf32>
    %142 = vector.multi_reduction <add>, %141, %cst_75 [1] : vector<8x32xf32> to vector<8xf32>
    %143 = vector.shape_cast %142 : vector<8xf32> to vector<8x1xf32>
    %cst_76 = arith.constant 3.200000e+01 : f32
    %144 = vector.broadcast %cst_76 : f32 to vector<8x1xf32>
    %145 = arith.divf %143, %144 : vector<8x1xf32>
    %146 = vector.broadcast %138 : vector<8x1xf32> to vector<8x32xf32>
    %147 = arith.subf %130, %146 : vector<8x32xf32>
    %cst_77 = arith.constant 9.99999974E-6 : f32
    %148 = vector.broadcast %cst_77 : f32 to vector<8x1xf32>
    %149 = arith.addf %145, %148 : vector<8x1xf32>
    %150 = math.rsqrt %149 : vector<8x1xf32>
    %151 = vector.broadcast %150 : vector<8x1xf32> to vector<8x32xf32>
    %152 = arith.mulf %147, %151 : vector<8x32xf32>
    %153 = vector.broadcast %132 : vector<1x32xf32> to vector<8x32xf32>
    %154 = arith.mulf %152, %153 : vector<8x32xf32>
    %155 = vector.broadcast %134 : vector<1x32xf32> to vector<8x32xf32>
    %156 = arith.addf %154, %155 : vector<8x32xf32>
    %c0_78 = arith.constant 0 : index
    %c0_79 = arith.constant 0 : index
    %c0_80 = arith.constant 0 : index
    %157 = vector.load %arg16[%c0_78, %c0_79, %c0_80] : memref<1x8x32xf32, #tpu.memory_space<vmem>>, vector<1x8x32xf32>
    %158 = vector.shape_cast %157 : vector<1x8x32xf32> to vector<8x32xf32>
    %159 = vector.shape_cast %156 : vector<8x32xf32> to vector<1x8x32xf32>
    tpu.vector_store %arg16[%c0_78, %c0_79, %c0_80], %159 {strides = array<i32>} : memref<1x8x32xf32, #tpu.memory_space<vmem>>, vector<1x8x32xf32>,
    return
  }
  func.func @transform_0(%arg0: i32, %arg1: i32) -> (i32, i32, i32) {
    %c0_i32 = arith.constant 0 : i32
    %c0_i32_0 = arith.constant 0 : i32
    %c0_i32_1 = arith.constant 0 : i32
    return %arg0, %c0_i32, %c0_i32_0 : i32, i32, i32
  }
  func.func @transform_1(%arg0: i32, %arg1: i32) -> (i32, i32, i32) {
    %c0_i32 = arith.constant 0 : i32
    %c0_i32_0 = arith.constant 0 : i32
    %c0_i32_1 = arith.constant 0 : i32
    return %arg0, %c0_i32, %c0_i32_0 : i32, i32, i32
  }
  func.func @transform_2(%arg0: i32, %arg1: i32) -> (i32, i32) {
    %c0_i32 = arith.constant 0 : i32
    %c0_i32_0 = arith.constant 0 : i32
    %c0_i32_1 = arith.constant 0 : i32
    return %c0_i32, %c0_i32_0 : i32, i32
  }
  func.func @transform_3(%arg0: i32, %arg1: i32) -> (i32, i32) {
    %c0_i32 = arith.constant 0 : i32
    %c0_i32_0 = arith.constant 0 : i32
    %c0_i32_1 = arith.constant 0 : i32
    return %c0_i32, %c0_i32_0 : i32, i32
  }
  func.func @transform_4(%arg0: i32, %arg1: i32) -> (i32, i32, i32, i32) {
    %c0_i32 = arith.constant 0 : i32
    %c0_i32_0 = arith.constant 0 : i32
    %c0_i32_1 = arith.constant 0 : i32
    %c0_i32_2 = arith.constant 0 : i32
    return %arg1, %c0_i32, %c0_i32_0, %c0_i32_1 : i32, i32, i32, i32
  }
  func.func @transform_5(%arg0: i32, %arg1: i32) -> (i32, i32, i32, i32) {
    %c0_i32 = arith.constant 0 : i32
    %c0_i32_0 = arith.constant 0 : i32
    %c0_i32_1 = arith.constant 0 : i32
    %c0_i32_2 = arith.constant 0 : i32
    return %arg1, %c0_i32, %c0_i32_0, %c0_i32_1 : i32, i32, i32, i32
  }
  func.func @transform_6(%arg0: i32, %arg1: i32) -> (i32, i32, i32) {
    %c0_i32 = arith.constant 0 : i32
    %c0_i32_0 = arith.constant 0 : i32
    %c0_i32_1 = arith.constant 0 : i32
    return %arg1, %c0_i32, %c0_i32_0 : i32, i32, i32
  }
  func.func @transform_7(%arg0: i32, %arg1: i32) -> (i32, i32, i32) {
    %c0_i32 = arith.constant 0 : i32
    %c0_i32_0 = arith.constant 0 : i32
    %c0_i32_1 = arith.constant 0 : i32
    return %arg1, %c0_i32, %c0_i32_0 : i32, i32, i32
  }
  func.func @transform_8(%arg0: i32, %arg1: i32) -> (i32, i32, i32) {
    %c0_i32 = arith.constant 0 : i32
    %c0_i32_0 = arith.constant 0 : i32
    %c0_i32_1 = arith.constant 0 : i32
    return %arg1, %c0_i32, %c0_i32_0 : i32, i32, i32
  }
  func.func @transform_9(%arg0: i32, %arg1: i32) -> (i32, i32, i32) {
    %c0_i32 = arith.constant 0 : i32
    %c0_i32_0 = arith.constant 0 : i32
    %c0_i32_1 = arith.constant 0 : i32
    return %arg1, %c0_i32, %c0_i32_0 : i32, i32, i32
  }
  func.func @transform_10(%arg0: i32, %arg1: i32) -> (i32, i32, i32) {
    %c0_i32 = arith.constant 0 : i32
    %c0_i32_0 = arith.constant 0 : i32
    %c0_i32_1 = arith.constant 0 : i32
    return %arg1, %c0_i32, %c0_i32_0 : i32, i32, i32
  }
  func.func @transform_11(%arg0: i32, %arg1: i32) -> (i32, i32, i32) {
    %c0_i32 = arith.constant 0 : i32
    %c0_i32_0 = arith.constant 0 : i32
    %c0_i32_1 = arith.constant 0 : i32
    return %arg1, %c0_i32, %c0_i32_0 : i32, i32, i32
  }
  func.func @transform_12(%arg0: i32, %arg1: i32) -> (i32, i32, i32) {
    %c0_i32 = arith.constant 0 : i32
    %c0_i32_0 = arith.constant 0 : i32
    %c0_i32_1 = arith.constant 0 : i32
    return %arg1, %c0_i32, %c0_i32_0 : i32, i32, i32
  }
  func.func @transform_13(%arg0: i32, %arg1: i32) -> (i32, i32, i32) {
    %c0_i32 = arith.constant 0 : i32
    %c0_i32_0 = arith.constant 0 : i32
    %c0_i32_1 = arith.constant 0 : i32
    return %arg1, %c0_i32, %c0_i32_0 : i32, i32, i32
  }
  func.func @transform_14(%arg0: i32, %arg1: i32) -> (i32, i32, i32) {
    %c0_i32 = arith.constant 0 : i32
    %c0_i32_0 = arith.constant 0 : i32
    %c0_i32_1 = arith.constant 0 : i32
    return %arg0, %c0_i32, %c0_i32_0 : i32, i32, i32
  }
}

module attributes {stable_mosaic.version = 11 : i64} {
  func.func @pooler_classifier_kernel(%arg0: memref<2x32xf32, #tpu.memory_space<vmem>>, %arg1: memref<32x32xf32, #tpu.memory_space<vmem>>, %arg2: memref<1x32xf32, #tpu.memory_space<vmem>>, %arg3: memref<32x128xf32, #tpu.memory_space<vmem>>, %arg4: memref<1x128xf32, #tpu.memory_space<vmem>>, %arg5: memref<2x128xf32, #tpu.memory_space<vmem>>) attributes {dimension_semantics = [], scalar_prefetch = 0 : i64, scratch_operands = 0 : i64, tpu.core_type = #tpu.core_type<tc>} {
    %c0 = arith.constant 0 : index
    %c0_0 = arith.constant 0 : index
    %0 = vector.load %arg0[%c0, %c0_0] : memref<2x32xf32, #tpu.memory_space<vmem>>, vector<2x32xf32>
    %c0_1 = arith.constant 0 : index
    %c0_2 = arith.constant 0 : index
    %1 = vector.load %arg1[%c0_1, %c0_2] : memref<32x32xf32, #tpu.memory_space<vmem>>, vector<32x32xf32>
    %cst = arith.constant dense<0.000000e+00> : vector<2x32xf32>
    %2 = tpu.matmul %0, %1, %cst {dimension_numbers = #tpu.dot_dimension_numbers<[1], [0], [0], [1], [0, 0, 1, 1], [], []>} : vector<2x32xf32>, vector<32x32xf32>, vector<2x32xf32> -> vector<2x32xf32>
    %c0_3 = arith.constant 0 : index
    %c0_4 = arith.constant 0 : index
    %3 = vector.load %arg2[%c0_3, %c0_4] : memref<1x32xf32, #tpu.memory_space<vmem>>, vector<1x32xf32>
    %4 = vector.broadcast %3 : vector<1x32xf32> to vector<2x32xf32>
    %5 = arith.addf %2, %4 : vector<2x32xf32>
    %c0_5 = arith.constant 0 : index
    %c0_6 = arith.constant 0 : index
    %6 = vector.load %arg3[%c0_5, %c0_6] : memref<32x128xf32, #tpu.memory_space<vmem>>, vector<32x128xf32>
    %cst_7 = arith.constant dense<0.000000e+00> : vector<2x128xf32>
    %7 = tpu.matmul %5, %6, %cst_7 {dimension_numbers = #tpu.dot_dimension_numbers<[1], [0], [0], [1], [0, 0, 1, 1], [], []>} : vector<2x32xf32>, vector<32x128xf32>, vector<2x128xf32> -> vector<2x128xf32>
    %c0_8 = arith.constant 0 : index
    %c0_9 = arith.constant 0 : index
    %8 = vector.load %arg4[%c0_8, %c0_9] : memref<1x128xf32, #tpu.memory_space<vmem>>, vector<1x128xf32>
    %9 = vector.broadcast %8 : vector<1x128xf32> to vector<2x128xf32>
    %10 = arith.addf %7, %9 : vector<2x128xf32>
    %c0_10 = arith.constant 0 : index
    %c0_11 = arith.constant 0 : index
    %11 = vector.load %arg5[%c0_10, %c0_11] : memref<2x128xf32, #tpu.memory_space<vmem>>, vector<2x128xf32>
    tpu.vector_store %arg5[%c0_10, %c0_11], %10 {strides = array<i32>} : memref<2x128xf32, #tpu.memory_space<vmem>>, vector<2x128xf32>,
    return
  }
}

</mosaic_0001>

<llo_original>
// kernel: jarvis_forward.3
$region0: #{jarvis_forward.3}
  #allocation0 [shape = 'u32[]', space=smem, size = 0x4, offset = 0x4, fixed_abs, tag = 'smem constant byte address 0x4 - core index']
  #allocation1 [shape = 'u32[144,128]{1,0:T(1,128)}', space=vmem, size = 0x12000, scoped, tag = 'internal scratch']
  %s0 = inlined_call_operand.vmem [shape: f32[2,32], index: 0, kind: input, shape index: {}]
  %s1 = inlined_call_operand.vmem [shape: f32[32,32], index: 1, kind: input, shape index: {}]
  %s2 = inlined_call_operand.vmem [shape: f32[1,32], index: 2, kind: input, shape index: {}]
  %s3 = inlined_call_operand.vmem [shape: f32[32,128], index: 3, kind: input, shape index: {}]
  %s4 = inlined_call_operand.vmem [shape: f32[1,128], index: 4, kind: input, shape index: {}]
  %s5 = inlined_call_operand.hbm [shape: f32[2,128], index: 5, kind: output, shape index: {}]
  %s6 = sld [smem:[#allocation0]]
  $region30: #{jarvis_forward.3} parent=0
    _
  %s8 = ssub.s32 1, %s6
  %s9 = scalar_select 0, %s8, %s6
  $region1: #{jarvis_forward.3} parent=0
    #allocation2 [shape = 'u8[1024]{0}', space=vmem, size = 0x400, scoped, tag = 'output window, operand 0, single buffered']
    #allocation3 [shape = 's32[1]{0}', space=sflag, size = 0x4, scoped, tag = 'scoped memory for jarvis_forward.3']
    %10 = vsyncpa [#allocation3], 0
    // Predicated region
    $region2: #{jarvis_forward.3} parent=1 // pred_check
      _
    $region3: #{jarvis_forward.3} parent=1 // pred_check_branch
      %12 = sbr.rel (0) target = $region5
    $region4: #{jarvis_forward.3} parent=1 // pred_region
      _
    $region5: #{jarvis_forward.3} parent=1 // pred_fallthru
      _
    // Predicated region
    $region6: #{jarvis_forward.3} parent=1 // pred_check
      _
    $region7: #{jarvis_forward.3} parent=1 // pred_check_branch
      %14 = sbr.rel (0) target = $region9
    $region8: #{jarvis_forward.3} parent=1 // pred_region
      _
    $region9: #{jarvis_forward.3} parent=1 // pred_fallthru
      _
    // Predicated region
    $region10: #{jarvis_forward.3} parent=1 // pred_check
      _
    $region11: #{jarvis_forward.3} parent=1 // pred_check_branch
      %16 = sbr.rel (0) target = $region13
    $region12: #{jarvis_forward.3} parent=1 // pred_region
      _
    $region13: #{jarvis_forward.3} parent=1 // pred_fallthru
      _
    // Predicated region
    $region14: #{jarvis_forward.3} parent=1 // pred_check
      _
    $region15: #{jarvis_forward.3} parent=1 // pred_check_branch
      %18 = sbr.rel (0) target = $region17
    $region16: #{jarvis_forward.3} parent=1 // pred_region
      _
    $region17: #{jarvis_forward.3} parent=1 // pred_fallthru
      _
    // Predicated region
    $region18: #{jarvis_forward.3} parent=1 // pred_check
      _
    $region19: #{jarvis_forward.3} parent=1 // pred_check_branch
      %20 = sbr.rel (0) target = $region21
    $region20: #{jarvis_forward.3} parent=1 // pred_region
      _
    $region21: #{jarvis_forward.3} parent=1 // pred_fallthru
      _
    %v21 = vld [vmem:[%s0] sm:$0x3]
    %v22 = vld [vmem:[%s1] sm:$0xff]
    %v23 = vld [vmem:[%s1 + $0x8] sm:$0xff]
    %v24 = vld [vmem:[%s1 + $0x10] sm:$0xff]
    %v25 = vld [vmem:[%s1 + $0x18] sm:$0xff]
    %v26 = vld [vmem:[%s2] sm:$0x1]
    %v28 = vlaneseq
    %v29 = vshrl.u32 %v28, 7
    %v30 = vsub.s32 0, %v29
    %v31 = vrot.slane %v26, %v30
    %vm33 = vcmask 261120
    %v35 = vsel %vm33, %v21, 0
    %37 = vmatprep.subr.mxu0 0.0
    %38 = vmatpush1.msra.mxu0 0.0
    %39 = vmatprep.subr.mxu0 0.0
    %40 = vmatpush1.msra.mxu0 0.0
    %41 = vmatprep.subr.mxu0 0.0
    %42 = vmatpush1.msra.mxu0 0.0
    %43 = vmatprep.subr.mxu0 0.0
    %44 = vmatpush1.msra.mxu0 0.0
    %45 = vmatprep.subr.mxu0 0.0
    %46 = vmatpush1.msra.mxu0 0.0
    %47 = vmatprep.subr.mxu0 0.0
    %48 = vmatpush1.msra.mxu0 0.0
    %49 = vmatprep.subr.mxu0 0.0
    %50 = vmatpush1.msra.mxu0 0.0
    %51 = vmatprep.subr.mxu0 0.0
    %52 = vmatpush1.msra.mxu0 0.0
    %53 = vmatprep.subr.mxu0 0.0
    %54 = vmatpush1.msra.mxu0 0.0
    %55 = vmatprep.subr.mxu0 0.0
    %56 = vmatpush1.msra.mxu0 0.0
    %57 = vmatprep.subr.mxu0 0.0
    %58 = vmatpush1.msra.mxu0 0.0
    %59 = vmatprep.subr.mxu0 0.0
    %60 = vmatpush1.msra.mxu0 0.0
    %61 = vmatprep.subr.mxu0 0.0
    %62 = vmatpush1.msra.mxu0 %v25
    %63 = vmatprep.subr.mxu0 0.0
    %64 = vmatpush1.msra.mxu0 %v24
    %65 = vmatprep.subr.mxu0 0.0
    %66 = vmatpush1.msra.mxu0 %v23
    %67 = vmatprep.subr.mxu0 0.0
    %68 = vmatpush1.msra.mxu0 %v22
    %69 = vmatprep.subr.mxu0 0.0
    %70 = vmatpush2.msra.mxu0 0.0
    %71 = vmatprep.subr.mxu0 0.0
    %72 = vmatpush2.msra.mxu0 0.0
    %73 = vmatprep.subr.mxu0 0.0
    %74 = vmatpush2.msra.mxu0 0.0
    %75 = vmatprep.subr.mxu0 0.0
    %76 = vmatpush2.msra.mxu0 0.0
    %77 = vmatprep.subr.mxu0 0.0
    %78 = vmatpush2.msra.mxu0 0.0
    %79 = vmatprep.subr.mxu0 0.0
    %80 = vmatpush2.msra.mxu0 0.0
    %81 = vmatprep.subr.mxu0 0.0
    %82 = vmatpush2.msra.mxu0 0.0
    %83 = vmatprep.subr.mxu0 0.0
    %84 = vmatpush2.msra.mxu0 0.0
    %85 = vmatprep.subr.mxu0 0.0
    %86 = vmatpush2.msra.mxu0 0.0
    %87 = vmatprep.subr.mxu0 0.0
    %88 = vmatpush2.msra.mxu0 0.0
    %89 = vmatprep.subr.mxu0 0.0
    %90 = vmatpush2.msra.mxu0 0.0
    %91 = vmatprep.subr.mxu0 0.0
    %92 = vmatpush2.msra.mxu0 0.0
    %93 = vmatprep.subr.mxu0 0.0
    %94 = vmatpush2.msra.mxu0 0.0
    %95 = vmatprep.subr.mxu0 0.0
    %96 = vmatpush2.msra.mxu0 0.0
    %97 = vmatprep.subr.mxu0 0.0
    %98 = vmatpush2.msra.mxu0 0.0
    %99 = vmatprep.subr.mxu0 0.0
    %100 = vmatpush2.msra.mxu0 0.0
    %101 = vmatprep.mubr.f32.mxu0 0.0
    %102 = vmatmul.mubr.f32.gmra.mxu0 %v35
    %v103 = vpop.f32.mrf.mxu0
    %v104 = vadd.f32 %v31, %v103
    %v105 = vpop.f32.mrf.mxu0
    %106 = vdwg.mxu0
    %v107 = vld [vmem:[%s3] sm:$0xff]
    %v108 = vld [vmem:[%s3 + $0x8] sm:$0xff]
    %v109 = vld [vmem:[%s3 + $0x10] sm:$0xff]
    %v110 = vld [vmem:[%s3 + $0x18] sm:$0xff]
    %v111 = vld [vmem:[%s4] sm:$0x1]
    %v113 = vlaneseq
    %v114 = vshrl.u32 %v113, 7
    %v115 = vsub.s32 0, %v114
    %v116 = vrot.slane %v111, %v115
    %v119 = vsel %vm33, %v104, 0
    %121 = vmatprep.subr.mxu0 0.0
    %122 = vmatpush1.msra.mxu0 0.0
    %123 = vmatprep.subr.mxu0 0.0
    %124 = vmatpush1.msra.mxu0 0.0
    %125 = vmatprep.subr.mxu0 0.0
    %126 = vmatpush1.msra.mxu0 0.0
    %127 = vmatprep.subr.mxu0 0.0
    %128 = vmatpush1.msra.mxu0 0.0
    %129 = vmatprep.subr.mxu0 0.0
    %130 = vmatpush1.msra.mxu0 0.0
    %131 = vmatprep.subr.mxu0 0.0
    %132 = vmatpush1.msra.mxu0 0.0
    %133 = vmatprep.subr.mxu0 0.0
    %134 = vmatpush1.msra.mxu0 0.0
    %135 = vmatprep.subr.mxu0 0.0
    %136 = vmatpush1.msra.mxu0 0.0
    %137 = vmatprep.subr.mxu0 0.0
    %138 = vmatpush1.msra.mxu0 0.0
    %139 = vmatprep.subr.mxu0 0.0
    %140 = vmatpush1.msra.mxu0 0.0
    %141 = vmatprep.subr.mxu0 0.0
    %142 = vmatpush1.msra.mxu0 0.0
    %143 = vmatprep.subr.mxu0 0.0
    %144 = vmatpush1.msra.mxu0 0.0
    %145 = vmatprep.subr.mxu0 0.0
    %146 = vmatpush1.msra.mxu0 %v110
    %147 = vmatprep.subr.mxu0 0.0
    %148 = vmatpush1.msra.mxu0 %v109
    %149 = vmatprep.subr.mxu0 0.0
    %150 = vmatpush1.msra.mxu0 %v108
    %151 = vmatprep.subr.mxu0 0.0
    %152 = vmatpush1.msra.mxu0 %v107
    %153 = vmatprep.subr.mxu0 0.0
    %154 = vmatpush2.msra.mxu0 0.0
    %155 = vmatprep.subr.mxu0 0.0
    %156 = vmatpush2.msra.mxu0 0.0
    %157 = vmatprep.subr.mxu0 0.0
    %158 = vmatpush2.msra.mxu0 0.0
    %159 = vmatprep.subr.mxu0 0.0
    %160 = vmatpush2.msra.mxu0 0.0
    %161 = vmatprep.subr.mxu0 0.0
    %162 = vmatpush2.msra.mxu0 0.0
    %163 = vmatprep.subr.mxu0 0.0
    %164 = vmatpush2.msra.mxu0 0.0
    %165 = vmatprep.subr.mxu0 0.0
    %166 = vmatpush2.msra.mxu0 0.0
    %167 = vmatprep.subr.mxu0 0.0
    %168 = vmatpush2.msra.mxu0 0.0
    %169 = vmatprep.subr.mxu0 0.0
    %170 = vmatpush2.msra.mxu0 0.0
    %171 = vmatprep.subr.mxu0 0.0
    %172 = vmatpush2.msra.mxu0 0.0
    %173 = vmatprep.subr.mxu0 0.0
    %174 = vmatpush2.msra.mxu0 0.0
    %175 = vmatprep.subr.mxu0 0.0
    %176 = vmatpush2.msra.mxu0 0.0
    %177 = vmatprep.subr.mxu0 0.0
    %178 = vmatpush2.msra.mxu0 0.0
    %179 = vmatprep.subr.mxu0 0.0
    %180 = vmatpush2.msra.mxu0 0.0
    %181 = vmatprep.subr.mxu0 0.0
    %182 = vmatpush2.msra.mxu0 0.0
    %183 = vmatprep.subr.mxu0 0.0
    %184 = vmatpush2.msra.mxu0 0.0
    %185 = vmatprep.mubr.f32.mxu0 0.0
    %186 = vmatmul.mubr.f32.gmra.mxu0 %v119
    %v187 = vpop.f32.mrf.mxu0
    %v188 = vadd.f32 %v116, %v187
    %v189 = vpop.f32.mrf.mxu0
    %190 = vdwg.mxu0
    %191 = vst [vmem:[#allocation2] sm:$0x3] %v188
    // Predicated region
    $region22: #{jarvis_forward.3} parent=1 // pred_check
      _
    $region23: #{jarvis_forward.3} parent=1 // pred_check_branch
      %193 = sbr.rel (0) target = $region25
    $region24: #{jarvis_forward.3} parent=1 // pred_region
      %s195 = ssub.s32 32, 32
      %196 = vsyncadd [#allocation3], %s195
      %s198 = sshll.u32 [#allocation2], 4
      %s199 = int_to_ptr.vmem [resolvable:$true] %s198
      %201 = dma.vmem_to_hbm [thread:$0]  %s199, 32, %s5, [#allocation3]
    $region25: #{jarvis_forward.3} parent=1 // pred_fallthru
      _
    // Predicated region
    $region26: #{jarvis_forward.3} parent=1 // pred_check
      _
    $region27: #{jarvis_forward.3} parent=1 // pred_check_branch
      %203 = sbr.rel (0) target = $region29
    $region28: #{jarvis_forward.3} parent=1 // pred_region
      %204 = dma.done [#allocation3], 32
    $region29: #{jarvis_forward.3} parent=1 // pred_fallthru
      _
    %205 = vsyncpa [#allocation3], 1

// kernel: jarvis_forward.2
$region0: #{jarvis_forward.2}
  #allocation0 [shape = 'u32[]', space=smem, size = 0x4, offset = 0x4, fixed_abs, tag = 'smem constant byte address 0x4 - core index']
  #allocation1 [shape = 'u32[144,128]{1,0:T(1,128)}', space=vmem, size = 0x12000, scoped, tag = 'internal scratch']
  #allocation2 [shape = 'f32[8,32]{1,0:T(8,128)}', space=vmem, size = 0x1000, scoped, tag = 'scratch operand']
  %s0 = inlined_call_operand.vmem [shape: f32[2,8,32], index: 0, kind: input, shape index: {}]
  %s1 = inlined_call_operand.vmem [shape: f32[2,1,8], index: 1, kind: input, shape index: {}]
  %s2 = inlined_call_operand.vmem [shape: f32[1,32], index: 2, kind: input, shape index: {}]
  %s3 = inlined_call_operand.vmem [shape: f32[1,32], index: 3, kind: input, shape index: {}]
  %s4 = inlined_call_operand.vmem [shape: f32[2,4,32,24], index: 4, kind: input, shape index: {}]
  %s5 = inlined_call_operand.vmem [shape: f32[2,4,1,24], index: 5, kind: input, shape index: {}]
  %s6 = inlined_call_operand.vmem [shape: f32[2,32,64], index: 6, kind: input, shape index: {}]
  %s7 = inlined_call_operand.vmem [shape: f32[2,1,64], index: 7, kind: input, shape index: {}]
  %s8 = inlined_call_operand.vmem [shape: f32[2,64,32], index: 8, kind: input, shape index: {}]
  %s9 = inlined_call_operand.vmem [shape: f32[2,1,32], index: 9, kind: input, shape index: {}]
  %s10 = inlined_call_operand.vmem [shape: f32[2,1,32], index: 10, kind: input, shape index: {}]
  %s11 = inlined_call_operand.vmem [shape: f32[2,1,32], index: 11, kind: input, shape index: {}]
  %s12 = inlined_call_operand.vmem [shape: f32[2,1,32], index: 12, kind: input, shape index: {}]
  %s13 = inlined_call_operand.vmem [shape: f32[2,1,32], index: 13, kind: input, shape index: {}]
  %s14 = inlined_call_operand.vmem [shape: f32[2,8,32], index: 14, kind: output, shape index: {}]
  %s15 = sld [smem:[#allocation0]]
  $region93: #{jarvis_forward.2} parent=0
    _
  %s17 = ssub.s32 1, %s15
  %s18 = scalar_select 0, %s17, %s15
  loop: start=0, step=1, limit=6
  $region2: #{jarvis_forward.2} parent=0 // loop_pre_header
    _
  $region3: #{jarvis_forward.2} parent=0 // loop_header
    %s20 = sphi 0, %s24
    %p21 = scmp.ge.s32.totalorder %s20, 6
    %s27 = sphi 0, %s39
    %s28 = sphi 0, %s35
    %s29 = sphi 0, %s27
    %s30 = sphi 0, %s28
    %s31 = sphi 0, %s29
    %s32 = sphi 0, %s30
    %s42 = sphi 0, %s44
    %s45 = sphi 0, %s42
    %s46 = sphi 0, %s45
    %s62 = sphi 0, %s46
    %s68 = sphi 0, %s70
    %s71 = sphi 0, %s68
    %s72 = sphi 0, %s71
    %s88 = sphi 0, %s72
    %s92 = sphi 0, %s92
    %s94 = sphi 0, %s92
    %s95 = sphi 0, %s94
    %s109 = sphi 0, %s95
    %s113 = sphi 0, %s113
    %s115 = sphi 0, %s113
    %s116 = sphi 0, %s115
    %s130 = sphi 0, %s116
    %s136 = sphi 0, %s138
    %s139 = sphi 0, %s136
    %s140 = sphi 0, %s139
    %s156 = sphi 0, %s140
    %s162 = sphi 0, %s164
    %s165 = sphi 0, %s162
    %s166 = sphi 0, %s165
    %s182 = sphi 0, %s166
    %s188 = sphi 0, %s190
    %s191 = sphi 0, %s188
    %s192 = sphi 0, %s191
    %s208 = sphi 0, %s192
    %s214 = sphi 0, %s216
    %s217 = sphi 0, %s214
    %s218 = sphi 0, %s217
    %s234 = sphi 0, %s218
    %s240 = sphi 0, %s242
    %s243 = sphi 0, %s240
    %s244 = sphi 0, %s243
    %s260 = sphi 0, %s244
    %s266 = sphi 0, %s268
    %s269 = sphi 0, %s266
    %s270 = sphi 0, %s269
    %s286 = sphi 0, %s270
    %s292 = sphi 0, %s294
    %s295 = sphi 0, %s292
    %s296 = sphi 0, %s295
    %s312 = sphi 0, %s296
    %s318 = sphi 0, %s320
    %s321 = sphi 0, %s318
    %s322 = sphi 0, %s321
    %s338 = sphi 0, %s322
    %s344 = sphi 0, %s346
    %s347 = sphi 0, %s344
    %s348 = sphi 0, %s347
    %s364 = sphi 0, %s348
    %s370 = sphi 0, %s372
    %s373 = sphi 0, %s370
    %s374 = sphi 0, %s373
    %s390 = sphi 0, %s374
    %s396 = sphi 0, %s398
    %s399 = sphi 0, %s396
    %s400 = sphi 0, %s399
    %s416 = sphi 0, %s400
  $region4: #{jarvis_forward.2} parent=0 // loop_header_branch
    %23 = sbr.rel (%p21) target = $region8
  $region5: #{jarvis_forward.2} parent=0 // loop_body
    %s25 = ssub.s32 %s20, 1
    %s26 = ssub.s32 %s20, 2
    %s33 = sadd.s32 1, %s28
    %p34 = scmp.ge.s32.totalorder %s33, 2
    %s35 = scalar_select %p34, 0, %s33
    %s36 = sadd.s32 1, %s27
    %s37 = scalar_select %p34, %s36, %s27
    %p38 = scmp.ge.s32.totalorder %s37, 2
    %s39 = scalar_select %p38, 0, %s37
    %s40 = ssub.s32 %s27, %s39
    %p41 = scmp.eq.s32.totalorder %s40, 0
    %s43 = sadd.s32 %s42, 1
    %s44 = scalar_select %p41, %s42, %s43
    %p47 = pneg %p41
    %p48 = scmp.eq.s32.totalorder %s20, 3
    %p49 = por %p47, %p48
    %p50 = scmp.ne.s32.totalorder %s42, %s45
    %p51 = scmp.eq.s32.totalorder %s20, 0
    %p52 = por %p50, %p51
    %p53 = scmp.ne.s32.totalorder %s42, %s45
    %p54 = scmp.eq.s32.totalorder %s25, 3
    %p55 = por %p53, %p54
    %p56 = scmp.ne.s32.totalorder %s45, %s46
    %p57 = scmp.eq.s32.totalorder %s25, 0
    %p58 = por %p56, %p57
    %p59 = scmp.ne.s32.totalorder %s45, %s46
    %p60 = scmp.eq.s32.totalorder %s26, 3
    %p61 = por %p59, %p60
    %p63 = scmp.ne.s32.totalorder %s46, %s62
    %p64 = scmp.eq.s32.totalorder %s26, 0
    %p65 = por %p63, %p64
    %s66 = ssub.s32 %s27, %s39
    %p67 = scmp.eq.s32.totalorder %s66, 0
    %s69 = sadd.s32 %s68, 1
    %s70 = scalar_select %p67, %s68, %s69
    %p73 = pneg %p67
    %p74 = scmp.eq.s32.totalorder %s20, 3
    %p75 = por %p73, %p74
    %p76 = scmp.ne.s32.totalorder %s68, %s71
    %p77 = scmp.eq.s32.totalorder %s20, 0
    %p78 = por %p76, %p77
    %p79 = scmp.ne.s32.totalorder %s68, %s71
    %p80 = scmp.eq.s32.totalorder %s25, 3
    %p81 = por %p79, %p80
    %p82 = scmp.ne.s32.totalorder %s71, %s72
    %p83 = scmp.eq.s32.totalorder %s25, 0
    %p84 = por %p82, %p83
    %p85 = scmp.ne.s32.totalorder %s71, %s72
    %p86 = scmp.eq.s32.totalorder %s26, 3
    %p87 = por %p85, %p86
    %p89 = scmp.ne.s32.totalorder %s72, %s88
    %p90 = scmp.eq.s32.totalorder %s26, 0
    %p91 = por %p89, %p90
    %s93 = sadd.s32 %s92, 1
    %p96 = scmp.eq.s32.totalorder %s20, 3
    %p97 = scmp.ne.s32.totalorder %s92, %s94
    %p98 = scmp.eq.s32.totalorder %s20, 0
    %p99 = por %p97, %p98
    %p100 = scmp.ne.s32.totalorder %s92, %s94
    %p101 = scmp.eq.s32.totalorder %s25, 3
    %p102 = por %p100, %p101
    %p103 = scmp.ne.s32.totalorder %s94, %s95
    %p104 = scmp.eq.s32.totalorder %s25, 0
    %p105 = por %p103, %p104
    %p106 = scmp.ne.s32.totalorder %s94, %s95
    %p107 = scmp.eq.s32.totalorder %s26, 3
    %p108 = por %p106, %p107
    %p110 = scmp.ne.s32.totalorder %s95, %s109
    %p111 = scmp.eq.s32.totalorder %s26, 0
    %p112 = por %p110, %p111
    %s114 = sadd.s32 %s113, 1
    %p117 = scmp.eq.s32.totalorder %s20, 3
    %p118 = scmp.ne.s32.totalorder %s113, %s115
    %p119 = scmp.eq.s32.totalorder %s20, 0
    %p120 = por %p118, %p119
    %p121 = scmp.ne.s32.totalorder %s113, %s115
    %p122 = scmp.eq.s32.totalorder %s25, 3
    %p123 = por %p121, %p122
    %p124 = scmp.ne.s32.totalorder %s115, %s116
    %p125 = scmp.eq.s32.totalorder %s25, 0
    %p126 = por %p124, %p125
    %p127 = scmp.ne.s32.totalorder %s115, %s116
    %p128 = scmp.eq.s32.totalorder %s26, 3
    %p129 = por %p127, %p128
    %p131 = scmp.ne.s32.totalorder %s116, %s130
    %p132 = scmp.eq.s32.totalorder %s26, 0
    %p133 = por %p131, %p132
    %s134 = ssub.s32 %s28, %s35
    %p135 = scmp.eq.s32.totalorder %s134, 0
    %s137 = sadd.s32 %s136, 1
    %s138 = scalar_select %p135, %s136, %s137
    %p141 = pneg %p135
    %p142 = scmp.eq.s32.totalorder %s20, 3
    %p143 = por %p141, %p142
    %p144 = scmp.ne.s32.totalorder %s136, %s139
    %p145 = scmp.eq.s32.totalorder %s20, 0
    %p146 = por %p144, %p145
    %p147 = scmp.ne.s32.totalorder %s136, %s139
    %p148 = scmp.eq.s32.totalorder %s25, 3
    %p149 = por %p147, %p148
    %p150 = scmp.ne.s32.totalorder %s139, %s140
    %p151 = scmp.eq.s32.totalorder %s25, 0
    %p152 = por %p150, %p151
    %p153 = scmp.ne.s32.totalorder %s139, %s140
    %p154 = scmp.eq.s32.totalorder %s26, 3
    %p155 = por %p153, %p154
    %p157 = scmp.ne.s32.totalorder %s140, %s156
    %p158 = scmp.eq.s32.totalorder %s26, 0
    %p159 = por %p157, %p158
    %s160 = ssub.s32 %s28, %s35
    %p161 = scmp.eq.s32.totalorder %s160, 0
    %s163 = sadd.s32 %s162, 1
    %s164 = scalar_select %p161, %s162, %s163
    %p167 = pneg %p161
    %p168 = scmp.eq.s32.totalorder %s20, 3
    %p169 = por %p167, %p168
    %p170 = scmp.ne.s32.totalorder %s162, %s165
    %p171 = scmp.eq.s32.totalorder %s20, 0
    %p172 = por %p170, %p171
    %p173 = scmp.ne.s32.totalorder %s162, %s165
    %p174 = scmp.eq.s32.totalorder %s25, 3
    %p175 = por %p173, %p174
    %p176 = scmp.ne.s32.totalorder %s165, %s166
    %p177 = scmp.eq.s32.totalorder %s25, 0
    %p178 = por %p176, %p177
    %p179 = scmp.ne.s32.totalorder %s165, %s166
    %p180 = scmp.eq.s32.totalorder %s26, 3
    %p181 = por %p179, %p180
    %p183 = scmp.ne.s32.totalorder %s166, %s182
    %p184 = scmp.eq.s32.totalorder %s26, 0
    %p185 = por %p183, %p184
    %s186 = ssub.s32 %s28, %s35
    %p187 = scmp.eq.s32.totalorder %s186, 0
    %s189 = sadd.s32 %s188, 1
    %s190 = scalar_select %p187, %s188, %s189
    %p193 = pneg %p187
    %p194 = scmp.eq.s32.totalorder %s20, 3
    %p195 = por %p193, %p194
    %p196 = scmp.ne.s32.totalorder %s188, %s191
    %p197 = scmp.eq.s32.totalorder %s20, 0
    %p198 = por %p196, %p197
    %p199 = scmp.ne.s32.totalorder %s188, %s191
    %p200 = scmp.eq.s32.totalorder %s25, 3
    %p201 = por %p199, %p200
    %p202 = scmp.ne.s32.totalorder %s191, %s192
    %p203 = scmp.eq.s32.totalorder %s25, 0
    %p204 = por %p202, %p203
    %p205 = scmp.ne.s32.totalorder %s191, %s192
    %p206 = scmp.eq.s32.totalorder %s26, 3
    %p207 = por %p205, %p206
    %p209 = scmp.ne.s32.totalorder %s192, %s208
    %p210 = scmp.eq.s32.totalorder %s26, 0
    %p211 = por %p209, %p210
    %s212 = ssub.s32 %s28, %s35
    %p213 = scmp.eq.s32.totalorder %s212, 0
    %s215 = sadd.s32 %s214, 1
    %s216 = scalar_select %p213, %s214, %s215
    %p219 = pneg %p213
    %p220 = scmp.eq.s32.totalorder %s20, 3
    %p221 = por %p219, %p220
    %p222 = scmp.ne.s32.totalorder %s214, %s217
    %p223 = scmp.eq.s32.totalorder %s20, 0
    %p224 = por %p222, %p223
    %p225 = scmp.ne.s32.totalorder %s214, %s217
    %p226 = scmp.eq.s32.totalorder %s25, 3
    %p227 = por %p225, %p226
    %p228 = scmp.ne.s32.totalorder %s217, %s218
    %p229 = scmp.eq.s32.totalorder %s25, 0
    %p230 = por %p228, %p229
    %p231 = scmp.ne.s32.totalorder %s217, %s218
    %p232 = scmp.eq.s32.totalorder %s26, 3
    %p233 = por %p231, %p232
    %p235 = scmp.ne.s32.totalorder %s218, %s234
    %p236 = scmp.eq.s32.totalorder %s26, 0
    %p237 = por %p235, %p236
    %s238 = ssub.s32 %s28, %s35
    %p239 = scmp.eq.s32.totalorder %s238, 0
    %s241 = sadd.s32 %s240, 1
    %s242 = scalar_select %p239, %s240, %s241
    %p245 = pneg %p239
    %p246 = scmp.eq.s32.totalorder %s20, 3
    %p247 = por %p245, %p246
    %p248 = scmp.ne.s32.totalorder %s240, %s243
    %p249 = scmp.eq.s32.totalorder %s20, 0
    %p250 = por %p248, %p249
    %p251 = scmp.ne.s32.totalorder %s240, %s243
    %p252 = scmp.eq.s32.totalorder %s25, 3
    %p253 = por %p251, %p252
    %p254 = scmp.ne.s32.totalorder %s243, %s244
    %p255 = scmp.eq.s32.totalorder %s25, 0
    %p256 = por %p254, %p255
    %p257 = scmp.ne.s32.totalorder %s243, %s244
    %p258 = scmp.eq.s32.totalorder %s26, 3
    %p259 = por %p257, %p258
    %p261 = scmp.ne.s32.totalorder %s244, %s260
    %p262 = scmp.eq.s32.totalorder %s26, 0
    %p263 = por %p261, %p262
    %s264 = ssub.s32 %s28, %s35
    %p265 = scmp.eq.s32.totalorder %s264, 0
    %s267 = sadd.s32 %s266, 1
    %s268 = scalar_select %p265, %s266, %s267
    %p271 = pneg %p265
    %p272 = scmp.eq.s32.totalorder %s20, 3
    %p273 = por %p271, %p272
    %p274 = scmp.ne.s32.totalorder %s266, %s269
    %p275 = scmp.eq.s32.totalorder %s20, 0
    %p276 = por %p274, %p275
    %p277 = scmp.ne.s32.totalorder %s266, %s269
    %p278 = scmp.eq.s32.totalorder %s25, 3
    %p279 = por %p277, %p278
    %p280 = scmp.ne.s32.totalorder %s269, %s270
    %p281 = scmp.eq.s32.totalorder %s25, 0
    %p282 = por %p280, %p281
    %p283 = scmp.ne.s32.totalorder %s269, %s270
    %p284 = scmp.eq.s32.totalorder %s26, 3
    %p285 = por %p283, %p284
    %p287 = scmp.ne.s32.totalorder %s270, %s286
    %p288 = scmp.eq.s32.totalorder %s26, 0
    %p289 = por %p287, %p288
    %s290 = ssub.s32 %s28, %s35
    %p291 = scmp.eq.s32.totalorder %s290, 0
    %s293 = sadd.s32 %s292, 1
    %s294 = scalar_select %p291, %s292, %s293
    %p297 = pneg %p291
    %p298 = scmp.eq.s32.totalorder %s20, 3
    %p299 = por %p297, %p298
    %p300 = scmp.ne.s32.totalorder %s292, %s295
    %p301 = scmp.eq.s32.totalorder %s20, 0
    %p302 = por %p300, %p301
    %p303 = scmp.ne.s32.totalorder %s292, %s295
    %p304 = scmp.eq.s32.totalorder %s25, 3
    %p305 = por %p303, %p304
    %p306 = scmp.ne.s32.totalorder %s295, %s296
    %p307 = scmp.eq.s32.totalorder %s25, 0
    %p308 = por %p306, %p307
    %p309 = scmp.ne.s32.totalorder %s295, %s296
    %p310 = scmp.eq.s32.totalorder %s26, 3
    %p311 = por %p309, %p310
    %p313 = scmp.ne.s32.totalorder %s296, %s312
    %p314 = scmp.eq.s32.totalorder %s26, 0
    %p315 = por %p313, %p314
    %s316 = ssub.s32 %s28, %s35
    %p317 = scmp.eq.s32.totalorder %s316, 0
    %s319 = sadd.s32 %s318, 1
    %s320 = scalar_select %p317, %s318, %s319
    %p323 = pneg %p317
    %p324 = scmp.eq.s32.totalorder %s20, 3
    %p325 = por %p323, %p324
    %p326 = scmp.ne.s32.totalorder %s318, %s321
    %p327 = scmp.eq.s32.totalorder %s20, 0
    %p328 = por %p326, %p327
    %p329 = scmp.ne.s32.totalorder %s318, %s321
    %p330 = scmp.eq.s32.totalorder %s25, 3
    %p331 = por %p329, %p330
    %p332 = scmp.ne.s32.totalorder %s321, %s322
    %p333 = scmp.eq.s32.totalorder %s25, 0
    %p334 = por %p332, %p333
    %p335 = scmp.ne.s32.totalorder %s321, %s322
    %p336 = scmp.eq.s32.totalorder %s26, 3
    %p337 = por %p335, %p336
    %p339 = scmp.ne.s32.totalorder %s322, %s338
    %p340 = scmp.eq.s32.totalorder %s26, 0
    %p341 = por %p339, %p340
    %s342 = ssub.s32 %s28, %s35
    %p343 = scmp.eq.s32.totalorder %s342, 0
    %s345 = sadd.s32 %s344, 1
    %s346 = scalar_select %p343, %s344, %s345
    %p349 = pneg %p343
    %p350 = scmp.eq.s32.totalorder %s20, 3
    %p351 = por %p349, %p350
    %p352 = scmp.ne.s32.totalorder %s344, %s347
    %p353 = scmp.eq.s32.totalorder %s20, 0
    %p354 = por %p352, %p353
    %p355 = scmp.ne.s32.totalorder %s344, %s347
    %p356 = scmp.eq.s32.totalorder %s25, 3
    %p357 = por %p355, %p356
    %p358 = scmp.ne.s32.totalorder %s347, %s348
    %p359 = scmp.eq.s32.totalorder %s25, 0
    %p360 = por %p358, %p359
    %p361 = scmp.ne.s32.totalorder %s347, %s348
    %p362 = scmp.eq.s32.totalorder %s26, 3
    %p363 = por %p361, %p362
    %p365 = scmp.ne.s32.totalorder %s348, %s364
    %p366 = scmp.eq.s32.totalorder %s26, 0
    %p367 = por %p365, %p366
    %s368 = ssub.s32 %s28, %s35
    %p369 = scmp.eq.s32.totalorder %s368, 0
    %s371 = sadd.s32 %s370, 1
    %s372 = scalar_select %p369, %s370, %s371
    %p375 = pneg %p369
    %p376 = scmp.eq.s32.totalorder %s20, 3
    %p377 = por %p375, %p376
    %p378 = scmp.ne.s32.totalorder %s370, %s373
    %p379 = scmp.eq.s32.totalorder %s20, 0
    %p380 = por %p378, %p379
    %p381 = scmp.ne.s32.totalorder %s370, %s373
    %p382 = scmp.eq.s32.totalorder %s25, 3
    %p383 = por %p381, %p382
    %p384 = scmp.ne.s32.totalorder %s373, %s374
    %p385 = scmp.eq.s32.totalorder %s25, 0
    %p386 = por %p384, %p385
    %p387 = scmp.ne.s32.totalorder %s373, %s374
    %p388 = scmp.eq.s32.totalorder %s26, 3
    %p389 = por %p387, %p388
    %p391 = scmp.ne.s32.totalorder %s374, %s390
    %p392 = scmp.eq.s32.totalorder %s26, 0
    %p393 = por %p391, %p392
    %s394 = ssub.s32 %s27, %s39
    %p395 = scmp.eq.s32.totalorder %s394, 0
    %s397 = sadd.s32 %s396, 1
    %s398 = scalar_select %p395, %s396, %s397
    %p401 = pneg %p395
    %p402 = scmp.eq.s32.totalorder %s20, 3
    %p403 = por %p401, %p402
    %p404 = scmp.ne.s32.totalorder %s396, %s399
    %p405 = scmp.eq.s32.totalorder %s20, 0
    %p406 = por %p404, %p405
    %p407 = scmp.ne.s32.totalorder %s396, %s399
    %p408 = scmp.eq.s32.totalorder %s25, 3
    %p409 = por %p407, %p408
    %p410 = scmp.ne.s32.totalorder %s399, %s400
    %p411 = scmp.eq.s32.totalorder %s25, 0
    %p412 = por %p410, %p411
    %p413 = scmp.ne.s32.totalorder %s399, %s400
    %p414 = scmp.eq.s32.totalorder %s26, 3
    %p415 = por %p413, %p414
    %p417 = scmp.ne.s32.totalorder %s400, %s416
    %p418 = scmp.eq.s32.totalorder %s26, 0
    %p419 = por %p417, %p418
    %p420 = scmp.le.s32.totalorder 1, %s20
    %p421 = scmp.lt.s32.totalorder %s20, 5
    %p422 = pnand %p420, %p421
    %p423 = pneg %p422
    // Predicated region
    $region9: #{jarvis_forward.2} parent=5 // pred_check
      _
    $region10: #{jarvis_forward.2} parent=5 // pred_check_branch
      %425 = sbr.rel (%p422) target = $region12
    $region11: #{jarvis_forward.2} parent=5 // pred_region
      %s426 = ssub.s32 %s20, 1
      // Predicated region
      $region13: #{jarvis_forward.2} parent=11 // pred_check
        %p427 = pneg %p105
      $region14: #{jarvis_forward.2} parent=11 // pred_check_branch
        %429 = sbr.rel (%p427) target = $region16
      $region15: #{jarvis_forward.2} parent=11 // pred_region
        _
      $region16: #{jarvis_forward.2} parent=11 // pred_fallthru
        _
      // Predicated region
      $region17: #{jarvis_forward.2} parent=11 // pred_check
        %p430 = pneg %p126
      $region18: #{jarvis_forward.2} parent=11 // pred_check_branch
        %432 = sbr.rel (%p430) target = $region20
      $region19: #{jarvis_forward.2} parent=11 // pred_region
        _
      $region20: #{jarvis_forward.2} parent=11 // pred_fallthru
        _
    $region12: #{jarvis_forward.2} parent=5 // pred_fallthru
      _
    %p433 = scmp.lt.s32.totalorder %s20, 4
    // Predicated region
    $region21: #{jarvis_forward.2} parent=5 // pred_check
      %p434 = pneg %p433
    $region22: #{jarvis_forward.2} parent=5 // pred_check_branch
      %436 = sbr.rel (%p434) target = $region24
    $region23: #{jarvis_forward.2} parent=5 // pred_region
      // Predicated region
      $region25: #{jarvis_forward.2} parent=23 // pred_check
        %p437 = pneg %p52
      $region26: #{jarvis_forward.2} parent=23 // pred_check_branch
        %439 = sbr.rel (%p437) target = $region28
      $region27: #{jarvis_forward.2} parent=23 // pred_region
        %p440 = scmp.lt.s32.totalorder %s27, 1
        %s441 = scalar_select %p440, %s27, 1
        %s442 = smul.addr %s441, 8
        %s443 = scalar_lea.vmem %s0, %s442
      $region28: #{jarvis_forward.2} parent=23 // pred_fallthru
        _
      // Predicated region
      $region29: #{jarvis_forward.2} parent=23 // pred_check
        %p444 = pneg %p78
      $region30: #{jarvis_forward.2} parent=23 // pred_check_branch
        %446 = sbr.rel (%p444) target = $region32
      $region31: #{jarvis_forward.2} parent=23 // pred_region
        %p447 = scmp.lt.s32.totalorder %s27, 1
        %s448 = scalar_select %p447, %s27, 1
        %s449 = scalar_lea.vmem %s1, %s448
      $region32: #{jarvis_forward.2} parent=23 // pred_fallthru
        _
      // Predicated region
      $region33: #{jarvis_forward.2} parent=23 // pred_check
        %p450 = pneg %p146
      $region34: #{jarvis_forward.2} parent=23 // pred_check_branch
        %452 = sbr.rel (%p450) target = $region36
      $region35: #{jarvis_forward.2} parent=23 // pred_region
        %p453 = scmp.lt.s32.totalorder %s28, 1
        %s454 = scalar_select %p453, %s28, 1
        %s455 = smul.addr %s454, 16
        %s456 = smul.addr %s455, 8
        %s457 = scalar_lea.vmem %s4, %s456
      $region36: #{jarvis_forward.2} parent=23 // pred_fallthru
        _
      // Predicated region
      $region37: #{jarvis_forward.2} parent=23 // pred_check
        %p458 = pneg %p172
      $region38: #{jarvis_forward.2} parent=23 // pred_check_branch
        %460 = sbr.rel (%p458) target = $region40
      $region39: #{jarvis_forward.2} parent=23 // pred_region
        %p461 = scmp.lt.s32.totalorder %s28, 1
        %s462 = scalar_select %p461, %s28, 1
        %s463 = smul.addr %s462, 4
        %s464 = scalar_lea.vmem %s5, %s463
      $region40: #{jarvis_forward.2} parent=23 // pred_fallthru
        _
      // Predicated region
      $region41: #{jarvis_forward.2} parent=23 // pred_check
        %p465 = pneg %p198
      $region42: #{jarvis_forward.2} parent=23 // pred_check_branch
        %467 = sbr.rel (%p465) target = $region44
      $region43: #{jarvis_forward.2} parent=23 // pred_region
        %p468 = scmp.lt.s32.totalorder %s28, 1
        %s469 = scalar_select %p468, %s28, 1
        %s470 = smul.addr %s469, 4
        %s471 = smul.addr %s470, 8
        %s472 = scalar_lea.vmem %s6, %s471
      $region44: #{jarvis_forward.2} parent=23 // pred_fallthru
        _
      // Predicated region
      $region45: #{jarvis_forward.2} parent=23 // pred_check
        %p473 = pneg %p224
      $region46: #{jarvis_forward.2} parent=23 // pred_check_branch
        %475 = sbr.rel (%p473) target = $region48
      $region47: #{jarvis_forward.2} parent=23 // pred_region
        %p476 = scmp.lt.s32.totalorder %s28, 1
        %s477 = scalar_select %p476, %s28, 1
        %s478 = scalar_lea.vmem %s7, %s477
      $region48: #{jarvis_forward.2} parent=23 // pred_fallthru
        _
      // Predicated region
      $region49: #{jarvis_forward.2} parent=23 // pred_check
        %p479 = pneg %p250
      $region50: #{jarvis_forward.2} parent=23 // pred_check_branch
        %481 = sbr.rel (%p479) target = $region52
      $region51: #{jarvis_forward.2} parent=23 // pred_region
        %p482 = scmp.lt.s32.totalorder %s28, 1
        %s483 = scalar_select %p482, %s28, 1
        %s484 = smul.addr %s483, 8
        %s485 = smul.addr %s484, 8
        %s486 = scalar_lea.vmem %s8, %s485
      $region52: #{jarvis_forward.2} parent=23 // pred_fallthru
        _
      // Predicated region
      $region53: #{jarvis_forward.2} parent=23 // pred_check
        %p487 = pneg %p276
      $region54: #{jarvis_forward.2} parent=23 // pred_check_branch
        %489 = sbr.rel (%p487) target = $region56
      $region55: #{jarvis_forward.2} parent=23 // pred_region
        %p490 = scmp.lt.s32.totalorder %s28, 1
        %s491 = scalar_select %p490, %s28, 1
        %s492 = scalar_lea.vmem %s9, %s491
      $region56: #{jarvis_forward.2} parent=23 // pred_fallthru
        _
      // Predicated region
      $region57: #{jarvis_forward.2} parent=23 // pred_check
        %p493 = pneg %p302
      $region58: #{jarvis_forward.2} parent=23 // pred_check_branch
        %495 = sbr.rel (%p493) target = $region60
      $region59: #{jarvis_forward.2} parent=23 // pred_region
        %p496 = scmp.lt.s32.totalorder %s28, 1
        %s497 = scalar_select %p496, %s28, 1
        %s498 = scalar_lea.vmem %s10, %s497
      $region60: #{jarvis_forward.2} parent=23 // pred_fallthru
        _
      // Predicated region
      $region61: #{jarvis_forward.2} parent=23 // pred_check
        %p499 = pneg %p328
      $region62: #{jarvis_forward.2} parent=23 // pred_check_branch
        %501 = sbr.rel (%p499) target = $region64
      $region63: #{jarvis_forward.2} parent=23 // pred_region
        %p502 = scmp.lt.s32.totalorder %s28, 1
        %s503 = scalar_select %p502, %s28, 1
        %s504 = scalar_lea.vmem %s11, %s503
      $region64: #{jarvis_forward.2} parent=23 // pred_fallthru
        _
      // Predicated region
      $region65: #{jarvis_forward.2} parent=23 // pred_check
        %p505 = pneg %p354
      $region66: #{jarvis_forward.2} parent=23 // pred_check_branch
        %507 = sbr.rel (%p505) target = $region68
      $region67: #{jarvis_forward.2} parent=23 // pred_region
        %p508 = scmp.lt.s32.totalorder %s28, 1
        %s509 = scalar_select %p508, %s28, 1
        %s510 = scalar_lea.vmem %s12, %s509
      $region68: #{jarvis_forward.2} parent=23 // pred_fallthru
        _
      // Predicated region
      $region69: #{jarvis_forward.2} parent=23 // pred_check
        %p511 = pneg %p380
      $region70: #{jarvis_forward.2} parent=23 // pred_check_branch
        %513 = sbr.rel (%p511) target = $region72
      $region71: #{jarvis_forward.2} parent=23 // pred_region
        %p514 = scmp.lt.s32.totalorder %s28, 1
        %s515 = scalar_select %p514, %s28, 1
        %s516 = scalar_lea.vmem %s13, %s515
      $region72: #{jarvis_forward.2} parent=23 // pred_fallthru
        _
    $region24: #{jarvis_forward.2} parent=5 // pred_fallthru
      _
    %p517 = scmp.le.s32.totalorder 1, %s20
    %p518 = scmp.lt.s32.totalorder %s20, 5
    %p519 = pnand %p517, %p518
    %p520 = pneg %p519
    // Predicated region
    $region73: #{jarvis_forward.2} parent=5 // pred_check
      _
    $region74: #{jarvis_forward.2} parent=5 // pred_check_branch
      %522 = sbr.rel (%p519) target = $region76
    $region75: #{jarvis_forward.2} parent=5 // pred_region
      %s523 = ssub.s32 %s20, 1
      %p524 = scmp.lt.s32.totalorder %s29, 1
      %s525 = scalar_select %p524, %s29, 1
      %s526 = smul.addr %s525, 8
      %s527 = scalar_lea.vmem %s0, %s526
      %p528 = pneg %p58
      %p529 = pneg %p55
      %p530 = scmp.lt.s32.totalorder %s29, 1
      %s531 = scalar_select %p530, %s29, 1
      %s532 = scalar_lea.vmem %s1, %s531
      %p533 = pneg %p84
      %p534 = pneg %p81
      %p535 = pneg %p105
      %p536 = pneg %p102
      %p537 = pneg %p126
      %p538 = pneg %p123
      %p539 = scmp.lt.s32.totalorder %s30, 1
      %s540 = scalar_select %p539, %s30, 1
      %s541 = smul.addr %s540, 16
      %s542 = smul.addr %s541, 8
      %s543 = scalar_lea.vmem %s4, %s542
      %p544 = pneg %p152
      %p545 = pneg %p149
      %p546 = scmp.lt.s32.totalorder %s30, 1
      %s547 = scalar_select %p546, %s30, 1
      %s548 = smul.addr %s547, 4
      %s549 = scalar_lea.vmem %s5, %s548
      %p550 = pneg %p178
      %p551 = pneg %p175
      %p552 = scmp.lt.s32.totalorder %s30, 1
      %s553 = scalar_select %p552, %s30, 1
      %s554 = smul.addr %s553, 4
      %s555 = smul.addr %s554, 8
      %s556 = scalar_lea.vmem %s6, %s555
      %p557 = pneg %p204
      %p558 = pneg %p201
      %p559 = scmp.lt.s32.totalorder %s30, 1
      %s560 = scalar_select %p559, %s30, 1
      %s561 = scalar_lea.vmem %s7, %s560
      %p562 = pneg %p230
      %p563 = pneg %p227
      %p564 = scmp.lt.s32.totalorder %s30, 1
      %s565 = scalar_select %p564, %s30, 1
      %s566 = smul.addr %s565, 8
      %s567 = smul.addr %s566, 8
      %s568 = scalar_lea.vmem %s8, %s567
      %p569 = pneg %p256
      %p570 = pneg %p253
      %p571 = scmp.lt.s32.totalorder %s30, 1
      %s572 = scalar_select %p571, %s30, 1
      %s573 = scalar_lea.vmem %s9, %s572
      %p574 = pneg %p282
      %p575 = pneg %p279
      %p576 = scmp.lt.s32.totalorder %s30, 1
      %s577 = scalar_select %p576, %s30, 1
      %s578 = scalar_lea.vmem %s10, %s577
      %p579 = pneg %p308
      %p580 = pneg %p305
      %p581 = scmp.lt.s32.totalorder %s30, 1
      %s582 = scalar_select %p581, %s30, 1
      %s583 = scalar_lea.vmem %s11, %s582
      %p584 = pneg %p334
      %p585 = pneg %p331
      %p586 = scmp.lt.s32.totalorder %s30, 1
      %s587 = scalar_select %p586, %s30, 1
      %s588 = scalar_lea.vmem %s12, %s587
      %p589 = pneg %p360
      %p590 = pneg %p357
      %p591 = scmp.lt.s32.totalorder %s30, 1
      %s592 = scalar_select %p591, %s30, 1
      %s593 = scalar_lea.vmem %s13, %s592
      %p594 = pneg %p386
      %p595 = pneg %p383
      %p596 = pneg %p412
      %p597 = pneg %p409
      %p598 = scmp.lt.s32.totalorder %s29, 1
      %s599 = scalar_select %p598, %s29, 1
      %s600 = smul.addr %s599, 8
      %s601 = scalar_lea.vmem %s14, %s600
      %p602 = scmp.lt.s32.totalorder %s29, 1
      %s603 = scalar_select %p602, %s29, 1
      %s604 = smul.addr %s603, 8
      %s605 = scalar_lea.vmem %s0, %s604
      %p606 = scmp.lt.s32.totalorder %s29, 1
      %s607 = scalar_select %p606, %s29, 1
      %s608 = scalar_lea.vmem %s1, %s607
      %p609 = scmp.lt.s32.totalorder %s30, 1
      %s610 = scalar_select %p609, %s30, 1
      %s611 = smul.addr %s610, 16
      %s612 = smul.addr %s611, 8
      %s613 = scalar_lea.vmem %s4, %s612
      %p614 = scmp.lt.s32.totalorder %s30, 1
      %s615 = scalar_select %p614, %s30, 1
      %s616 = smul.addr %s615, 4
      %s617 = scalar_lea.vmem %s5, %s616
      %p618 = scmp.lt.s32.totalorder %s30, 1
      %s619 = scalar_select %p618, %s30, 1
      %s620 = smul.addr %s619, 4
      %s621 = smul.addr %s620, 8
      %s622 = scalar_lea.vmem %s6, %s621
      %p623 = scmp.lt.s32.totalorder %s30, 1
      %s624 = scalar_select %p623, %s30, 1
      %s625 = scalar_lea.vmem %s7, %s624
      %p626 = scmp.lt.s32.totalorder %s30, 1
      %s627 = scalar_select %p626, %s30, 1
      %s628 = smul.addr %s627, 8
      %s629 = smul.addr %s628, 8
      %s630 = scalar_lea.vmem %s8, %s629
      %p631 = scmp.lt.s32.totalorder %s30, 1
      %s632 = scalar_select %p631, %s30, 1
      %s633 = scalar_lea.vmem %s9, %s632
      %p634 = scmp.lt.s32.totalorder %s30, 1
      %s635 = scalar_select %p634, %s30, 1
      %s636 = scalar_lea.vmem %s10, %s635
      %p637 = scmp.lt.s32.totalorder %s30, 1
      %s638 = scalar_select %p637, %s30, 1
      %s639 = scalar_lea.vmem %s11, %s638
      %p640 = scmp.lt.s32.totalorder %s30, 1
      %s641 = scalar_select %p640, %s30, 1
      %s642 = scalar_lea.vmem %s12, %s641
      %p643 = scmp.lt.s32.totalorder %s30, 1
      %s644 = scalar_select %p643, %s30, 1
      %s645 = scalar_lea.vmem %s13, %s644
      %p646 = scmp.lt.s32.totalorder %s29, 1
      %s647 = scalar_select %p646, %s29, 1
      %s648 = smul.addr %s647, 8
      %s649 = scalar_lea.vmem %s14, %s648
      %p650 = scmp.eq.s32.totalorder %s30, 0
      // Predicated region
      $region77: #{jarvis_forward.2} parent=75 // pred_check
        %p651 = pneg %p650
      $region78: #{jarvis_forward.2} parent=75 // pred_check_branch
        %653 = sbr.rel (%p651) target = $region80
      $region79: #{jarvis_forward.2} parent=75 // pred_region
        %v654 = vld [vmem:[%s605] sm:$0xff]
        %v655 = vld [vmem:[%s2] sm:$0x1]
        %v656 = vld [vmem:[%s3] sm:$0x1]
        %vm657 = vcmask 261120
        %v658 = vsel %vm657, %v654, 0.0
        %659 = vadd.xlane.f32.xlu0 %v658
        %v660 = vpop.xlane.xlu0 %659
        %v661 = vrcp.pop 32.0
        %v662 = vmul.f32 %v660, %v661
        %v663 = vsub.f32 %v654, %v662
        %v664 = vmul.f32 %v663, %v663
        %v665 = vsel %vm657, %v664, 0.0
        %666 = vadd.xlane.f32.xlu0 %v665
        %v667 = vpop.xlane.xlu0 %666
        %v668 = vmul.f32 %v667, %v661
        %v669 = vadd.f32 %v668, 1e-05
        %v670 = vrsqrt.pop %v669
        %v671 = vmul.f32 %v663, %v670
        %v673 = vlaneseq
        %v674 = vshrl.u32 %v673, 7
        %v675 = vsub.s32 0, %v674
        %v676 = vrot.slane %v655, %v675
        %v678 = vmul.f32 %v671, %v676
        %v680 = vlaneseq
        %v681 = vshrl.u32 %v680, 7
        %v682 = vsub.s32 0, %v681
        %v683 = vrot.slane %v656, %v682
        %v685 = vadd.f32 %v678, %v683
        %686 = vst.msk [vmem:[%s649] sm:$0xff] %vm657, %v685
      $region80: #{jarvis_forward.2} parent=75 // pred_fallthru
        _
      %v687 = vld [vmem:[%s649] sm:$0xff]
      %v688 = vld [vmem:[%s608] sm:$0x1]
      %v689 = vsub.f32 1.0, %v688
      %v690 = vmul.f32 %v689, -10000.0
      %v691 = vld [vmem:[%s613] sm:$0xff]
      %v692 = vld [vmem:[%s613 + $0x8] sm:$0xff]
      %v693 = vld [vmem:[%s613 + $0x10] sm:$0xff]
      %v694 = vld [vmem:[%s613 + $0x18] sm:$0xff]
      %v695 = vld [vmem:[%s613 + $0x20] sm:$0xff]
      %v696 = vld [vmem:[%s613 + $0x28] sm:$0xff]
      %v697 = vld [vmem:[%s613 + $0x30] sm:$0xff]
      %v698 = vld [vmem:[%s613 + $0x38] sm:$0xff]
      %v699 = vld [vmem:[%s613 + $0x40] sm:$0xff]
      %v700 = vld [vmem:[%s613 + $0x48] sm:$0xff]
      %v701 = vld [vmem:[%s613 + $0x50] sm:$0xff]
      %v702 = vld [vmem:[%s613 + $0x58] sm:$0xff]
      %v703 = vld [vmem:[%s613 + $0x60] sm:$0xff]
      %v704 = vld [vmem:[%s613 + $0x68] sm:$0xff]
      %v705 = vld [vmem:[%s613 + $0x70] sm:$0xff]
      %v706 = vld [vmem:[%s613 + $0x78] sm:$0xff]
      %v707 = vld [vmem:[%s617] sm:$0x1]
      %v708 = vld [vmem:[%s617 + $0x1] sm:$0x1]
      %v709 = vld [vmem:[%s617 + $0x2] sm:$0x1]
      %v710 = vld [vmem:[%s617 + $0x3] sm:$0x1]
      %v715 = vlaneseq
      %v716 = vshrl.u32 %v715, 7
      %v717 = vsub.s32 0, %v716
      %v718 = vrot.slane %v707, %v717
      %v719 = vlaneseq
      %v720 = vshrl.u32 %v719, 7
      %v721 = vsub.s32 0, %v720
      %v722 = vrot.slane %v708, %v721
      %v723 = vlaneseq
      %v724 = vshrl.u32 %v723, 7
      %v725 = vsub.s32 0, %v724
      %v726 = vrot.slane %v709, %v725
      %v727 = vlaneseq
      %v728 = vshrl.u32 %v727, 7
      %v729 = vsub.s32 0, %v728
      %v730 = vrot.slane %v710, %v729
      %vm735 = vcmask 261120
      %v737 = vsel %vm735, %v687, 0
      %739 = vmatprep.subr.mxu0 0.0
      %740 = vmatpush1.msra.mxu0 0.0
      %741 = vmatprep.subr.mxu0 0.0
      %742 = vmatpush1.msra.mxu0 0.0
      %743 = vmatprep.subr.mxu0 0.0
      %744 = vmatpush1.msra.mxu0 0.0
      %745 = vmatprep.subr.mxu0 0.0
      %746 = vmatpush1.msra.mxu0 0.0
      %747 = vmatprep.subr.mxu0 0.0
      %748 = vmatpush1.msra.mxu0 0.0
      %749 = vmatprep.subr.mxu0 0.0
      %750 = vmatpush1.msra.mxu0 0.0
      %751 = vmatprep.subr.mxu0 0.0
      %752 = vmatpush1.msra.mxu0 0.0
      %753 = vmatprep.subr.mxu0 0.0
      %754 = vmatpush1.msra.mxu0 0.0
      %755 = vmatprep.subr.mxu0 0.0
      %756 = vmatpush1.msra.mxu0 0.0
      %757 = vmatprep.subr.mxu0 0.0
      %758 = vmatpush1.msra.mxu0 0.0
      %759 = vmatprep.subr.mxu0 0.0
      %760 = vmatpush1.msra.mxu0 0.0
      %761 = vmatprep.subr.mxu0 0.0
      %762 = vmatpush1.msra.mxu0 0.0
      %763 = vmatprep.subr.mxu0 0.0
      %764 = vmatpush1.msra.mxu0 %v694
      %765 = vmatprep.subr.mxu0 0.0
      %766 = vmatpush1.msra.mxu0 %v693
      %767 = vmatprep.subr.mxu0 0.0
      %768 = vmatpush1.msra.mxu0 %v692
      %769 = vmatprep.subr.mxu0 0.0
      %770 = vmatpush1.msra.mxu0 %v691
      %771 = vmatprep.subr.mxu0 0.0
      %772 = vmatpush2.msra.mxu0 0.0
      %773 = vmatprep.subr.mxu0 0.0
      %774 = vmatpush2.msra.mxu0 0.0
      %775 = vmatprep.subr.mxu0 0.0
      %776 = vmatpush2.msra.mxu0 0.0
      %777 = vmatprep.subr.mxu0 0.0
      %778 = vmatpush2.msra.mxu0 0.0
      %779 = vmatprep.subr.mxu0 0.0
      %780 = vmatpush2.msra.mxu0 0.0
      %781 = vmatprep.subr.mxu0 0.0
      %782 = vmatpush2.msra.mxu0 0.0
      %783 = vmatprep.subr.mxu0 0.0
      %784 = vmatpush2.msra.mxu0 0.0
      %785 = vmatprep.subr.mxu0 0.0
      %786 = vmatpush2.msra.mxu0 0.0
      %787 = vmatprep.subr.mxu0 0.0
      %788 = vmatpush2.msra.mxu0 0.0
      %789 = vmatprep.subr.mxu0 0.0
      %790 = vmatpush2.msra.mxu0 0.0
      %791 = vmatprep.subr.mxu0 0.0
      %792 = vmatpush2.msra.mxu0 0.0
      %793 = vmatprep.subr.mxu0 0.0
      %794 = vmatpush2.msra.mxu0 0.0
      %795 = vmatprep.subr.mxu0 0.0
      %796 = vmatpush2.msra.mxu0 0.0
      %797 = vmatprep.subr.mxu0 0.0
      %798 = vmatpush2.msra.mxu0 0.0
      %799 = vmatprep.subr.mxu0 0.0
      %800 = vmatpush2.msra.mxu0 0.0
      %801 = vmatprep.subr.mxu0 0.0
      %802 = vmatpush2.msra.mxu0 0.0
      %803 = vmatprep.mubr.f32.mxu0 0.0
      %804 = vmatmul.mubr.f32.gmra.mxu0 %v737
      %v805 = vpop.f32.mrf.mxu0
      %v806 = vadd.f32 %v718, %v805
      %v807 = vpop.f32.mrf.mxu0
      %808 = vdwg.mxu0
      %809 = vmatprep.subr.mxu0 0.0
      %810 = vmatpush1.msra.mxu0 0.0
      %811 = vmatprep.subr.mxu0 0.0
      %812 = vmatpush1.msra.mxu0 0.0
      %813 = vmatprep.subr.mxu0 0.0
      %814 = vmatpush1.msra.mxu0 0.0
      %815 = vmatprep.subr.mxu0 0.0
      %816 = vmatpush1.msra.mxu0 0.0
      %817 = vmatprep.subr.mxu0 0.0
      %818 = vmatpush1.msra.mxu0 0.0
      %819 = vmatprep.subr.mxu0 0.0
      %820 = vmatpush1.msra.mxu0 0.0
      %821 = vmatprep.subr.mxu0 0.0
      %822 = vmatpush1.msra.mxu0 0.0
      %823 = vmatprep.subr.mxu0 0.0
      %824 = vmatpush1.msra.mxu0 0.0
      %825 = vmatprep.subr.mxu0 0.0
      %826 = vmatpush1.msra.mxu0 0.0
      %827 = vmatprep.subr.mxu0 0.0
      %828 = vmatpush1.msra.mxu0 0.0
      %829 = vmatprep.subr.mxu0 0.0
      %830 = vmatpush1.msra.mxu0 0.0
      %831 = vmatprep.subr.mxu0 0.0
      %832 = vmatpush1.msra.mxu0 0.0
      %833 = vmatprep.subr.mxu0 0.0
      %834 = vmatpush1.msra.mxu0 %v698
      %835 = vmatprep.subr.mxu0 0.0
      %836 = vmatpush1.msra.mxu0 %v697
      %837 = vmatprep.subr.mxu0 0.0
      %838 = vmatpush1.msra.mxu0 %v696
      %839 = vmatprep.subr.mxu0 0.0
      %840 = vmatpush1.msra.mxu0 %v695
      %841 = vmatprep.subr.mxu0 0.0
      %842 = vmatpush2.msra.mxu0 0.0
      %843 = vmatprep.subr.mxu0 0.0
      %844 = vmatpush2.msra.mxu0 0.0
      %845 = vmatprep.subr.mxu0 0.0
      %846 = vmatpush2.msra.mxu0 0.0
      %847 = vmatprep.subr.mxu0 0.0
      %848 = vmatpush2.msra.mxu0 0.0
      %849 = vmatprep.subr.mxu0 0.0
      %850 = vmatpush2.msra.mxu0 0.0
      %851 = vmatprep.subr.mxu0 0.0
      %852 = vmatpush2.msra.mxu0 0.0
      %853 = vmatprep.subr.mxu0 0.0
      %854 = vmatpush2.msra.mxu0 0.0
      %855 = vmatprep.subr.mxu0 0.0
      %856 = vmatpush2.msra.mxu0 0.0
      %857 = vmatprep.subr.mxu0 0.0
      %858 = vmatpush2.msra.mxu0 0.0
      %859 = vmatprep.subr.mxu0 0.0
      %860 = vmatpush2.msra.mxu0 0.0
      %861 = vmatprep.subr.mxu0 0.0
      %862 = vmatpush2.msra.mxu0 0.0
      %863 = vmatprep.subr.mxu0 0.0
      %864 = vmatpush2.msra.mxu0 0.0
      %865 = vmatprep.subr.mxu0 0.0
      %866 = vmatpush2.msra.mxu0 0.0
      %867 = vmatprep.subr.mxu0 0.0
      %868 = vmatpush2.msra.mxu0 0.0
      %869 = vmatprep.subr.mxu0 0.0
      %870 = vmatpush2.msra.mxu0 0.0
      %871 = vmatprep.subr.mxu0 0.0
      %872 = vmatpush2.msra.mxu0 0.0
      %873 = vmatprep.mubr.f32.mxu0 0.0
      %874 = vmatmul.mubr.f32.gmra.mxu0 %v737
      %v875 = vpop.f32.mrf.mxu0
      %v876 = vadd.f32 %v722, %v875
      %v877 = vpop.f32.mrf.mxu0
      %878 = vdwg.mxu0
      %879 = vmatprep.subr.mxu0 0.0
      %880 = vmatpush1.msra.mxu0 0.0
      %881 = vmatprep.subr.mxu0 0.0
      %882 = vmatpush1.msra.mxu0 0.0
      %883 = vmatprep.subr.mxu0 0.0
      %884 = vmatpush1.msra.mxu0 0.0
      %885 = vmatprep.subr.mxu0 0.0
      %886 = vmatpush1.msra.mxu0 0.0
      %887 = vmatprep.subr.mxu0 0.0
      %888 = vmatpush1.msra.mxu0 0.0
      %889 = vmatprep.subr.mxu0 0.0
      %890 = vmatpush1.msra.mxu0 0.0
      %891 = vmatprep.subr.mxu0 0.0
      %892 = vmatpush1.msra.mxu0 0.0
      %893 = vmatprep.subr.mxu0 0.0
      %894 = vmatpush1.msra.mxu0 0.0
      %895 = vmatprep.subr.mxu0 0.0
      %896 = vmatpush1.msra.mxu0 0.0
      %897 = vmatprep.subr.mxu0 0.0
      %898 = vmatpush1.msra.mxu0 0.0
      %899 = vmatprep.subr.mxu0 0.0
      %900 = vmatpush1.msra.mxu0 0.0
      %901 = vmatprep.subr.mxu0 0.0
      %902 = vmatpush1.msra.mxu0 0.0
      %903 = vmatprep.subr.mxu0 0.0
      %904 = vmatpush1.msra.mxu0 %v702
      %905 = vmatprep.subr.mxu0 0.0
      %906 = vmatpush1.msra.mxu0 %v701
      %907 = vmatprep.subr.mxu0 0.0
      %908 = vmatpush1.msra.mxu0 %v700
      %909 = vmatprep.subr.mxu0 0.0
      %910 = vmatpush1.msra.mxu0 %v699
      %911 = vmatprep.subr.mxu0 0.0
      %912 = vmatpush2.msra.mxu0 0.0
      %913 = vmatprep.subr.mxu0 0.0
      %914 = vmatpush2.msra.mxu0 0.0
      %915 = vmatprep.subr.mxu0 0.0
      %916 = vmatpush2.msra.mxu0 0.0
      %917 = vmatprep.subr.mxu0 0.0
      %918 = vmatpush2.msra.mxu0 0.0
      %919 = vmatprep.subr.mxu0 0.0
      %920 = vmatpush2.msra.mxu0 0.0
      %921 = vmatprep.subr.mxu0 0.0
      %922 = vmatpush2.msra.mxu0 0.0
      %923 = vmatprep.subr.mxu0 0.0
      %924 = vmatpush2.msra.mxu0 0.0
      %925 = vmatprep.subr.mxu0 0.0
      %926 = vmatpush2.msra.mxu0 0.0
      %927 = vmatprep.subr.mxu0 0.0
      %928 = vmatpush2.msra.mxu0 0.0
      %929 = vmatprep.subr.mxu0 0.0
      %930 = vmatpush2.msra.mxu0 0.0
      %931 = vmatprep.subr.mxu0 0.0
      %932 = vmatpush2.msra.mxu0 0.0
      %933 = vmatprep.subr.mxu0 0.0
      %934 = vmatpush2.msra.mxu0 0.0
      %935 = vmatprep.subr.mxu0 0.0
      %936 = vmatpush2.msra.mxu0 0.0
      %937 = vmatprep.subr.mxu0 0.0
      %938 = vmatpush2.msra.mxu0 0.0
      %939 = vmatprep.subr.mxu0 0.0
      %940 = vmatpush2.msra.mxu0 0.0
      %941 = vmatprep.subr.mxu0 0.0
      %942 = vmatpush2.msra.mxu0 0.0
      %943 = vmatprep.mubr.f32.mxu0 0.0
      %944 = vmatmul.mubr.f32.gmra.mxu0 %v737
      %v945 = vpop.f32.mrf.mxu0
      %v946 = vadd.f32 %v726, %v945
      %v947 = vpop.f32.mrf.mxu0
      %948 = vdwg.mxu0
      %949 = vmatprep.subr.mxu0 0.0
      %950 = vmatpush1.msra.mxu0 0.0
      %951 = vmatprep.subr.mxu0 0.0
      %952 = vmatpush1.msra.mxu0 0.0
      %953 = vmatprep.subr.mxu0 0.0
      %954 = vmatpush1.msra.mxu0 0.0
      %955 = vmatprep.subr.mxu0 0.0
      %956 = vmatpush1.msra.mxu0 0.0
      %957 = vmatprep.subr.mxu0 0.0
      %958 = vmatpush1.msra.mxu0 0.0
      %959 = vmatprep.subr.mxu0 0.0
      %960 = vmatpush1.msra.mxu0 0.0
      %961 = vmatprep.subr.mxu0 0.0
      %962 = vmatpush1.msra.mxu0 0.0
      %963 = vmatprep.subr.mxu0 0.0
      %964 = vmatpush1.msra.mxu0 0.0
      %965 = vmatprep.subr.mxu0 0.0
      %966 = vmatpush1.msra.mxu0 0.0
      %967 = vmatprep.subr.mxu0 0.0
      %968 = vmatpush1.msra.mxu0 0.0
      %969 = vmatprep.subr.mxu0 0.0
      %970 = vmatpush1.msra.mxu0 0.0
      %971 = vmatprep.subr.mxu0 0.0
      %972 = vmatpush1.msra.mxu0 0.0
      %973 = vmatprep.subr.mxu0 0.0
      %974 = vmatpush1.msra.mxu0 %v706
      %975 = vmatprep.subr.mxu0 0.0
      %976 = vmatpush1.msra.mxu0 %v705
      %977 = vmatprep.subr.mxu0 0.0
      %978 = vmatpush1.msra.mxu0 %v704
      %979 = vmatprep.subr.mxu0 0.0
      %980 = vmatpush1.msra.mxu0 %v703
      %981 = vmatprep.subr.mxu0 0.0
      %982 = vmatpush2.msra.mxu0 0.0
      %983 = vmatprep.subr.mxu0 0.0
      %984 = vmatpush2.msra.mxu0 0.0
      %985 = vmatprep.subr.mxu0 0.0
      %986 = vmatpush2.msra.mxu0 0.0
      %987 = vmatprep.subr.mxu0 0.0
      %988 = vmatpush2.msra.mxu0 0.0
      %989 = vmatprep.subr.mxu0 0.0
      %990 = vmatpush2.msra.mxu0 0.0
      %991 = vmatprep.subr.mxu0 0.0
      %992 = vmatpush2.msra.mxu0 0.0
      %993 = vmatprep.subr.mxu0 0.0
      %994 = vmatpush2.msra.mxu0 0.0
      %995 = vmatprep.subr.mxu0 0.0
      %996 = vmatpush2.msra.mxu0 0.0
      %997 = vmatprep.subr.mxu0 0.0
      %998 = vmatpush2.msra.mxu0 0.0
      %999 = vmatprep.subr.mxu0 0.0
      %1000 = vmatpush2.msra.mxu0 0.0
      %1001 = vmatprep.subr.mxu0 0.0
      %1002 = vmatpush2.msra.mxu0 0.0
      %1003 = vmatprep.subr.mxu0 0.0
      %1004 = vmatpush2.msra.mxu0 0.0
      %1005 = vmatprep.subr.mxu0 0.0
      %1006 = vmatpush2.msra.mxu0 0.0
      %1007 = vmatprep.subr.mxu0 0.0
      %1008 = vmatpush2.msra.mxu0 0.0
      %1009 = vmatprep.subr.mxu0 0.0
      %1010 = vmatpush2.msra.mxu0 0.0
      %1011 = vmatprep.subr.mxu0 0.0
      %1012 = vmatpush2.msra.mxu0 0.0
      %1013 = vmatprep.mubr.f32.mxu0 0.0
      %1014 = vmatmul.mubr.f32.gmra.mxu0 %v737
      %v1015 = vpop.f32.mrf.mxu0
      %v1016 = vadd.f32 %v730, %v1015
      %v1017 = vpop.f32.mrf.mxu0
      %1018 = vdwg.mxu0
      %v1020 = vlaneseq
      %v1021 = vshrl.u32 %v1020, 7
      %v1022 = vsub.s32 0, %v1021
      %v1023 = vrot.slane %v690, %v1022
      %1026 = vrot.lane.b32.xlu0 %v806, 120
      %v1027 = vpop.permute.xlu0 %1026
      %vm1028 = vcmask 64512
      %v1029 = vsel %vm1028, %v806, 0
      %v1031 = vsel %vm1028, %v1027, 0
      %1033 = vmatprep.subr.mxu0 0.0
      %1034 = vmatpush1.xpose.msra.mxu0 0.0
      %1035 = vmatprep.subr.mxu0 0.0
      %1036 = vmatpush1.xpose.msra.mxu0 0.0
      %1037 = vmatprep.subr.mxu0 0.0
      %1038 = vmatpush1.xpose.msra.mxu0 0.0
      %1039 = vmatprep.subr.mxu0 0.0
      %1040 = vmatpush1.xpose.msra.mxu0 0.0
      %1041 = vmatprep.subr.mxu0 0.0
      %1042 = vmatpush1.xpose.msra.mxu0 0.0
      %1043 = vmatprep.subr.mxu0 0.0
      %1044 = vmatpush1.xpose.msra.mxu0 0.0
      %1045 = vmatprep.subr.mxu0 0.0
      %1046 = vmatpush1.xpose.msra.mxu0 0.0
      %1047 = vmatprep.subr.mxu0 0.0
      %1048 = vmatpush1.xpose.msra.mxu0 0.0
      %1049 = vmatprep.subr.mxu0 0.0
      %1050 = vmatpush1.xpose.msra.mxu0 0.0
      %1051 = vmatprep.subr.mxu0 0.0
      %1052 = vmatpush1.xpose.msra.mxu0 0.0
      %1053 = vmatprep.subr.mxu0 0.0
      %1054 = vmatpush1.xpose.msra.mxu0 0.0
      %1055 = vmatprep.subr.mxu0 0.0
      %1056 = vmatpush1.xpose.msra.mxu0 0.0
      %1057 = vmatprep.subr.mxu0 0.0
      %1058 = vmatpush1.xpose.msra.mxu0 0.0
      %1059 = vmatprep.subr.mxu0 0.0
      %1060 = vmatpush1.xpose.msra.mxu0 0.0
      %1061 = vmatprep.subr.mxu0 0.0
      %1062 = vmatpush1.xpose.msra.mxu0 0.0
      %1063 = vmatprep.subr.mxu0 0.0
      %1064 = vmatpush1.xpose.msra.mxu0 %v1031
      %1065 = vmatprep.subr.mxu0 0.0
      %1066 = vmatpush2.xpose.msra.mxu0 0.0
      %1067 = vmatprep.subr.mxu0 0.0
      %1068 = vmatpush2.xpose.msra.mxu0 0.0
      %1069 = vmatprep.subr.mxu0 0.0
      %1070 = vmatpush2.xpose.msra.mxu0 0.0
      %1071 = vmatprep.subr.mxu0 0.0
      %1072 = vmatpush2.xpose.msra.mxu0 0.0
      %1073 = vmatprep.subr.mxu0 0.0
      %1074 = vmatpush2.xpose.msra.mxu0 0.0
      %1075 = vmatprep.subr.mxu0 0.0
      %1076 = vmatpush2.xpose.msra.mxu0 0.0
      %1077 = vmatprep.subr.mxu0 0.0
      %1078 = vmatpush2.xpose.msra.mxu0 0.0
      %1079 = vmatprep.subr.mxu0 0.0
      %1080 = vmatpush2.xpose.msra.mxu0 0.0
      %1081 = vmatprep.subr.mxu0 0.0
      %1082 = vmatpush2.xpose.msra.mxu0 0.0
      %1083 = vmatprep.subr.mxu0 0.0
      %1084 = vmatpush2.xpose.msra.mxu0 0.0
      %1085 = vmatprep.subr.mxu0 0.0
      %1086 = vmatpush2.xpose.msra.mxu0 0.0
      %1087 = vmatprep.subr.mxu0 0.0
      %1088 = vmatpush2.xpose.msra.mxu0 0.0
      %1089 = vmatprep.subr.mxu0 0.0
      %1090 = vmatpush2.xpose.msra.mxu0 0.0
      %1091 = vmatprep.subr.mxu0 0.0
      %1092 = vmatpush2.xpose.msra.mxu0 0.0
      %1093 = vmatprep.subr.mxu0 0.0
      %1094 = vmatpush2.xpose.msra.mxu0 0.0
      %1095 = vmatprep.subr.mxu0 0.0
      %1096 = vmatpush2.xpose.msra.mxu0 0.0
      %1097 = vmatprep.mubr.f32.mxu0 0.0
      %1098 = vmatmul.mubr.f32.gmra.mxu0 %v1029
      %v1099 = vpop.f32.mrf.mxu0
      %v1100 = vadd.f32 %v1023, %v1099
      %v1101 = vpop.f32.mrf.mxu0
      %1102 = vdwg.mxu0
      %1104 = vrot.lane.b32.xlu0 %v876, 120
      %v1105 = vpop.permute.xlu0 %1104
      %v1106 = vsel %vm1028, %v876, 0
      %v1108 = vsel %vm1028, %v1105, 0
      %1110 = vmatprep.subr.mxu0 0.0
      %1111 = vmatpush1.xpose.msra.mxu0 0.0
      %1112 = vmatprep.subr.mxu0 0.0
      %1113 = vmatpush1.xpose.msra.mxu0 0.0
      %1114 = vmatprep.subr.mxu0 0.0
      %1115 = vmatpush1.xpose.msra.mxu0 0.0
      %1116 = vmatprep.subr.mxu0 0.0
      %1117 = vmatpush1.xpose.msra.mxu0 0.0
      %1118 = vmatprep.subr.mxu0 0.0
      %1119 = vmatpush1.xpose.msra.mxu0 0.0
      %1120 = vmatprep.subr.mxu0 0.0
      %1121 = vmatpush1.xpose.msra.mxu0 0.0
      %1122 = vmatprep.subr.mxu0 0.0
      %1123 = vmatpush1.xpose.msra.mxu0 0.0
      %1124 = vmatprep.subr.mxu0 0.0
      %1125 = vmatpush1.xpose.msra.mxu0 0.0
      %1126 = vmatprep.subr.mxu0 0.0
      %1127 = vmatpush1.xpose.msra.mxu0 0.0
      %1128 = vmatprep.subr.mxu0 0.0
      %1129 = vmatpush1.xpose.msra.mxu0 0.0
      %1130 = vmatprep.subr.mxu0 0.0
      %1131 = vmatpush1.xpose.msra.mxu0 0.0
      %1132 = vmatprep.subr.mxu0 0.0
      %1133 = vmatpush1.xpose.msra.mxu0 0.0
      %1134 = vmatprep.subr.mxu0 0.0
      %1135 = vmatpush1.xpose.msra.mxu0 0.0
      %1136 = vmatprep.subr.mxu0 0.0
      %1137 = vmatpush1.xpose.msra.mxu0 0.0
      %1138 = vmatprep.subr.mxu0 0.0
      %1139 = vmatpush1.xpose.msra.mxu0 0.0
      %1140 = vmatprep.subr.mxu0 0.0
      %1141 = vmatpush1.xpose.msra.mxu0 %v1108
      %1142 = vmatprep.subr.mxu0 0.0
      %1143 = vmatpush2.xpose.msra.mxu0 0.0
      %1144 = vmatprep.subr.mxu0 0.0
      %1145 = vmatpush2.xpose.msra.mxu0 0.0
      %1146 = vmatprep.subr.mxu0 0.0
      %1147 = vmatpush2.xpose.msra.mxu0 0.0
      %1148 = vmatprep.subr.mxu0 0.0
      %1149 = vmatpush2.xpose.msra.mxu0 0.0
      %1150 = vmatprep.subr.mxu0 0.0
      %1151 = vmatpush2.xpose.msra.mxu0 0.0
      %1152 = vmatprep.subr.mxu0 0.0
      %1153 = vmatpush2.xpose.msra.mxu0 0.0
      %1154 = vmatprep.subr.mxu0 0.0
      %1155 = vmatpush2.xpose.msra.mxu0 0.0
      %1156 = vmatprep.subr.mxu0 0.0
      %1157 = vmatpush2.xpose.msra.mxu0 0.0
      %1158 = vmatprep.subr.mxu0 0.0
      %1159 = vmatpush2.xpose.msra.mxu0 0.0
      %1160 = vmatprep.subr.mxu0 0.0
      %1161 = vmatpush2.xpose.msra.mxu0 0.0
      %1162 = vmatprep.subr.mxu0 0.0
      %1163 = vmatpush2.xpose.msra.mxu0 0.0
      %1164 = vmatprep.subr.mxu0 0.0
      %1165 = vmatpush2.xpose.msra.mxu0 0.0
      %1166 = vmatprep.subr.mxu0 0.0
      %1167 = vmatpush2.xpose.msra.mxu0 0.0
      %1168 = vmatprep.subr.mxu0 0.0
      %1169 = vmatpush2.xpose.msra.mxu0 0.0
      %1170 = vmatprep.subr.mxu0 0.0
      %1171 = vmatpush2.xpose.msra.mxu0 0.0
      %1172 = vmatprep.subr.mxu0 0.0
      %1173 = vmatpush2.xpose.msra.mxu0 0.0
      %1174 = vmatprep.mubr.f32.mxu0 0.0
      %1175 = vmatmul.mubr.f32.gmra.mxu0 %v1106
      %v1176 = vpop.f32.mrf.mxu0
      %v1177 = vadd.f32 %v1023, %v1176
      %v1178 = vpop.f32.mrf.mxu0
      %1179 = vdwg.mxu0
      %1181 = vrot.lane.b32.xlu0 %v946, 120
      %v1182 = vpop.permute.xlu0 %1181
      %v1183 = vsel %vm1028, %v946, 0
      %v1185 = vsel %vm1028, %v1182, 0
      %1187 = vmatprep.subr.mxu0 0.0
      %1188 = vmatpush1.xpose.msra.mxu0 0.0
      %1189 = vmatprep.subr.mxu0 0.0
      %1190 = vmatpush1.xpose.msra.mxu0 0.0
      %1191 = vmatprep.subr.mxu0 0.0
      %1192 = vmatpush1.xpose.msra.mxu0 0.0
      %1193 = vmatprep.subr.mxu0 0.0
      %1194 = vmatpush1.xpose.msra.mxu0 0.0
      %1195 = vmatprep.subr.mxu0 0.0
      %1196 = vmatpush1.xpose.msra.mxu0 0.0
      %1197 = vmatprep.subr.mxu0 0.0
      %1198 = vmatpush1.xpose.msra.mxu0 0.0
      %1199 = vmatprep.subr.mxu0 0.0
      %1200 = vmatpush1.xpose.msra.mxu0 0.0
      %1201 = vmatprep.subr.mxu0 0.0
      %1202 = vmatpush1.xpose.msra.mxu0 0.0
      %1203 = vmatprep.subr.mxu0 0.0
      %1204 = vmatpush1.xpose.msra.mxu0 0.0
      %1205 = vmatprep.subr.mxu0 0.0
      %1206 = vmatpush1.xpose.msra.mxu0 0.0
      %1207 = vmatprep.subr.mxu0 0.0
      %1208 = vmatpush1.xpose.msra.mxu0 0.0
      %1209 = vmatprep.subr.mxu0 0.0
      %1210 = vmatpush1.xpose.msra.mxu0 0.0
      %1211 = vmatprep.subr.mxu0 0.0
      %1212 = vmatpush1.xpose.msra.mxu0 0.0
      %1213 = vmatprep.subr.mxu0 0.0
      %1214 = vmatpush1.xpose.msra.mxu0 0.0
      %1215 = vmatprep.subr.mxu0 0.0
      %1216 = vmatpush1.xpose.msra.mxu0 0.0
      %1217 = vmatprep.subr.mxu0 0.0
      %1218 = vmatpush1.xpose.msra.mxu0 %v1185
      %1219 = vmatprep.subr.mxu0 0.0
      %1220 = vmatpush2.xpose.msra.mxu0 0.0
      %1221 = vmatprep.subr.mxu0 0.0
      %1222 = vmatpush2.xpose.msra.mxu0 0.0
      %1223 = vmatprep.subr.mxu0 0.0
      %1224 = vmatpush2.xpose.msra.mxu0 0.0
      %1225 = vmatprep.subr.mxu0 0.0
      %1226 = vmatpush2.xpose.msra.mxu0 0.0
      %1227 = vmatprep.subr.mxu0 0.0
      %1228 = vmatpush2.xpose.msra.mxu0 0.0
      %1229 = vmatprep.subr.mxu0 0.0
      %1230 = vmatpush2.xpose.msra.mxu0 0.0
      %1231 = vmatprep.subr.mxu0 0.0
      %1232 = vmatpush2.xpose.msra.mxu0 0.0
      %1233 = vmatprep.subr.mxu0 0.0
      %1234 = vmatpush2.xpose.msra.mxu0 0.0
      %1235 = vmatprep.subr.mxu0 0.0
      %1236 = vmatpush2.xpose.msra.mxu0 0.0
      %1237 = vmatprep.subr.mxu0 0.0
      %1238 = vmatpush2.xpose.msra.mxu0 0.0
      %1239 = vmatprep.subr.mxu0 0.0
      %1240 = vmatpush2.xpose.msra.mxu0 0.0
      %1241 = vmatprep.subr.mxu0 0.0
      %1242 = vmatpush2.xpose.msra.mxu0 0.0
      %1243 = vmatprep.subr.mxu0 0.0
      %1244 = vmatpush2.xpose.msra.mxu0 0.0
      %1245 = vmatprep.subr.mxu0 0.0
      %1246 = vmatpush2.xpose.msra.mxu0 0.0
      %1247 = vmatprep.subr.mxu0 0.0
      %1248 = vmatpush2.xpose.msra.mxu0 0.0
      %1249 = vmatprep.subr.mxu0 0.0
      %1250 = vmatpush2.xpose.msra.mxu0 0.0
      %1251 = vmatprep.mubr.f32.mxu0 0.0
      %1252 = vmatmul.mubr.f32.gmra.mxu0 %v1183
      %v1253 = vpop.f32.mrf.mxu0
      %v1254 = vadd.f32 %v1023, %v1253
      %v1255 = vpop.f32.mrf.mxu0
      %1256 = vdwg.mxu0
      %1258 = vrot.lane.b32.xlu0 %v1016, 120
      %v1259 = vpop.permute.xlu0 %1258
      %v1260 = vsel %vm1028, %v1016, 0
      %v1262 = vsel %vm1028, %v1259, 0
      %1264 = vmatprep.subr.mxu0 0.0
      %1265 = vmatpush1.xpose.msra.mxu0 0.0
      %1266 = vmatprep.subr.mxu0 0.0
      %1267 = vmatpush1.xpose.msra.mxu0 0.0
      %1268 = vmatprep.subr.mxu0 0.0
      %1269 = vmatpush1.xpose.msra.mxu0 0.0
      %1270 = vmatprep.subr.mxu0 0.0
      %1271 = vmatpush1.xpose.msra.mxu0 0.0
      %1272 = vmatprep.subr.mxu0 0.0
      %1273 = vmatpush1.xpose.msra.mxu0 0.0
      %1274 = vmatprep.subr.mxu0 0.0
      %1275 = vmatpush1.xpose.msra.mxu0 0.0
      %1276 = vmatprep.subr.mxu0 0.0
      %1277 = vmatpush1.xpose.msra.mxu0 0.0
      %1278 = vmatprep.subr.mxu0 0.0
      %1279 = vmatpush1.xpose.msra.mxu0 0.0
      %1280 = vmatprep.subr.mxu0 0.0
      %1281 = vmatpush1.xpose.msra.mxu0 0.0
      %1282 = vmatprep.subr.mxu0 0.0
      %1283 = vmatpush1.xpose.msra.mxu0 0.0
      %1284 = vmatprep.subr.mxu0 0.0
      %1285 = vmatpush1.xpose.msra.mxu0 0.0
      %1286 = vmatprep.subr.mxu0 0.0
      %1287 = vmatpush1.xpose.msra.mxu0 0.0
      %1288 = vmatprep.subr.mxu0 0.0
      %1289 = vmatpush1.xpose.msra.mxu0 0.0
      %1290 = vmatprep.subr.mxu0 0.0
      %1291 = vmatpush1.xpose.msra.mxu0 0.0
      %1292 = vmatprep.subr.mxu0 0.0
      %1293 = vmatpush1.xpose.msra.mxu0 0.0
      %1294 = vmatprep.subr.mxu0 0.0
      %1295 = vmatpush1.xpose.msra.mxu0 %v1262
      %1296 = vmatprep.subr.mxu0 0.0
      %1297 = vmatpush2.xpose.msra.mxu0 0.0
      %1298 = vmatprep.subr.mxu0 0.0
      %1299 = vmatpush2.xpose.msra.mxu0 0.0
      %1300 = vmatprep.subr.mxu0 0.0
      %1301 = vmatpush2.xpose.msra.mxu0 0.0
      %1302 = vmatprep.subr.mxu0 0.0
      %1303 = vmatpush2.xpose.msra.mxu0 0.0
      %1304 = vmatprep.subr.mxu0 0.0
      %1305 = vmatpush2.xpose.msra.mxu0 0.0
      %1306 = vmatprep.subr.mxu0 0.0
      %1307 = vmatpush2.xpose.msra.mxu0 0.0
      %1308 = vmatprep.subr.mxu0 0.0
      %1309 = vmatpush2.xpose.msra.mxu0 0.0
      %1310 = vmatprep.subr.mxu0 0.0
      %1311 = vmatpush2.xpose.msra.mxu0 0.0
      %1312 = vmatprep.subr.mxu0 0.0
      %1313 = vmatpush2.xpose.msra.mxu0 0.0
      %1314 = vmatprep.subr.mxu0 0.0
      %1315 = vmatpush2.xpose.msra.mxu0 0.0
      %1316 = vmatprep.subr.mxu0 0.0
      %1317 = vmatpush2.xpose.msra.mxu0 0.0
      %1318 = vmatprep.subr.mxu0 0.0
      %1319 = vmatpush2.xpose.msra.mxu0 0.0
      %1320 = vmatprep.subr.mxu0 0.0
      %1321 = vmatpush2.xpose.msra.mxu0 0.0
      %1322 = vmatprep.subr.mxu0 0.0
      %1323 = vmatpush2.xpose.msra.mxu0 0.0
      %1324 = vmatprep.subr.mxu0 0.0
      %1325 = vmatpush2.xpose.msra.mxu0 0.0
      %1326 = vmatprep.subr.mxu0 0.0
      %1327 = vmatpush2.xpose.msra.mxu0 0.0
      %1328 = vmatprep.mubr.f32.mxu0 0.0
      %1329 = vmatmul.mubr.f32.gmra.mxu0 %v1260
      %v1330 = vpop.f32.mrf.mxu0
      %v1331 = vadd.f32 %v1023, %v1330
      %v1332 = vpop.f32.mrf.mxu0
      %1333 = vdwg.mxu0
      %v1334 = vsel %vm1028, %v1100, -inf
      %1335 = vmax.xlane.f32.xlu0 %v1334
      %v1336 = vpop.xlane.xlu0 %1335
      %v1337 = vsel %vm1028, %v1177, -inf
      %1338 = vmax.xlane.f32.xlu0 %v1337
      %v1339 = vpop.xlane.xlu0 %1338
      %v1340 = vsel %vm1028, %v1254, -inf
      %1341 = vmax.xlane.f32.xlu0 %v1340
      %v1342 = vpop.xlane.xlu0 %1341
      %v1343 = vsel %vm1028, %v1331, -inf
      %1344 = vmax.xlane.f32.xlu0 %v1343
      %v1345 = vpop.xlane.xlu0 %1344
      %v1346 = vsub.f32 %v1100, %v1336
      %v1347 = vsub.f32 %v1177, %v1339
      %v1348 = vsub.f32 %v1254, %v1342
      %v1349 = vsub.f32 %v1331, %v1345
      %v1350 = vmul.f32 %v1346, 1.442695
      %v1351 = vpow.pop %v1350
      %v1352 = vmul.f32 %v1347, 1.442695
      %v1353 = vpow.pop %v1352
      %v1354 = vmul.f32 %v1348, 1.442695
      %v1355 = vpow.pop %v1354
      %v1356 = vmul.f32 %v1349, 1.442695
      %v1357 = vpow.pop %v1356
      %v1358 = vsel %vm1028, %v1351, 0.0
      %1359 = vadd.xlane.f32.xlu0 %v1358
      %v1360 = vpop.xlane.xlu0 %1359
      %v1361 = vsel %vm1028, %v1353, 0.0
      %1362 = vadd.xlane.f32.xlu0 %v1361
      %v1363 = vpop.xlane.xlu0 %1362
      %v1364 = vsel %vm1028, %v1355, 0.0
      %1365 = vadd.xlane.f32.xlu0 %v1364
      %v1366 = vpop.xlane.xlu0 %1365
      %v1367 = vsel %vm1028, %v1357, 0.0
      %1368 = vadd.xlane.f32.xlu0 %v1367
      %v1369 = vpop.xlane.xlu0 %1368
      %v1370 = vrcp.pop %v1360
      %v1371 = vrcp.pop %v1363
      %v1372 = vrcp.pop %v1366
      %v1373 = vrcp.pop %v1369
      %v1374 = vmul.f32 %v1351, %v1370
      %v1375 = vmul.f32 %v1353, %v1371
      %v1376 = vmul.f32 %v1355, %v1372
      %v1377 = vmul.f32 %v1357, %v1373
      %1378 = vrot.lane.b32.xlu0 %v806, 112
      %v1379 = vpop.permute.xlu0 %1378
      %v1382 = vsel %vm1028, %v1374, 0
      %1384 = vmatprep.subr.mxu0 0.0
      %1385 = vmatpush1.msra.mxu0 0.0
      %1386 = vmatprep.subr.mxu0 0.0
      %1387 = vmatpush1.msra.mxu0 0.0
      %1388 = vmatprep.subr.mxu0 0.0
      %1389 = vmatpush1.msra.mxu0 0.0
      %1390 = vmatprep.subr.mxu0 0.0
      %1391 = vmatpush1.msra.mxu0 0.0
      %1392 = vmatprep.subr.mxu0 0.0
      %1393 = vmatpush1.msra.mxu0 0.0
      %1394 = vmatprep.subr.mxu0 0.0
      %1395 = vmatpush1.msra.mxu0 0.0
      %1396 = vmatprep.subr.mxu0 0.0
      %1397 = vmatpush1.msra.mxu0 0.0
      %1398 = vmatprep.subr.mxu0 0.0
      %1399 = vmatpush1.msra.mxu0 0.0
      %1400 = vmatprep.subr.mxu0 0.0
      %1401 = vmatpush1.msra.mxu0 0.0
      %1402 = vmatprep.subr.mxu0 0.0
      %1403 = vmatpush1.msra.mxu0 0.0
      %1404 = vmatprep.subr.mxu0 0.0
      %1405 = vmatpush1.msra.mxu0 0.0
      %1406 = vmatprep.subr.mxu0 0.0
      %1407 = vmatpush1.msra.mxu0 0.0
      %1408 = vmatprep.subr.mxu0 0.0
      %1409 = vmatpush1.msra.mxu0 0.0
      %1410 = vmatprep.subr.mxu0 0.0
      %1411 = vmatpush1.msra.mxu0 0.0
      %1412 = vmatprep.subr.mxu0 0.0
      %1413 = vmatpush1.msra.mxu0 0.0
      %1414 = vmatprep.subr.mxu0 0.0
      %1415 = vmatpush1.msra.mxu0 %v1379
      %1416 = vmatprep.subr.mxu0 0.0
      %1417 = vmatpush2.msra.mxu0 0.0
      %1418 = vmatprep.subr.mxu0 0.0
      %1419 = vmatpush2.msra.mxu0 0.0
      %1420 = vmatprep.subr.mxu0 0.0
      %1421 = vmatpush2.msra.mxu0 0.0
      %1422 = vmatprep.subr.mxu0 0.0
      %1423 = vmatpush2.msra.mxu0 0.0
      %1424 = vmatprep.subr.mxu0 0.0
      %1425 = vmatpush2.msra.mxu0 0.0
      %1426 = vmatprep.subr.mxu0 0.0
      %1427 = vmatpush2.msra.mxu0 0.0
      %1428 = vmatprep.subr.mxu0 0.0
      %1429 = vmatpush2.msra.mxu0 0.0
      %1430 = vmatprep.subr.mxu0 0.0
      %1431 = vmatpush2.msra.mxu0 0.0
      %1432 = vmatprep.subr.mxu0 0.0
      %1433 = vmatpush2.msra.mxu0 0.0
      %1434 = vmatprep.subr.mxu0 0.0
      %1435 = vmatpush2.msra.mxu0 0.0
      %1436 = vmatprep.subr.mxu0 0.0
      %1437 = vmatpush2.msra.mxu0 0.0
      %1438 = vmatprep.subr.mxu0 0.0
      %1439 = vmatpush2.msra.mxu0 0.0
      %1440 = vmatprep.subr.mxu0 0.0
      %1441 = vmatpush2.msra.mxu0 0.0
      %1442 = vmatprep.subr.mxu0 0.0
      %1443 = vmatpush2.msra.mxu0 0.0
      %1444 = vmatprep.subr.mxu0 0.0
      %1445 = vmatpush2.msra.mxu0 0.0
      %1446 = vmatprep.subr.mxu0 0.0
      %1447 = vmatpush2.msra.mxu0 0.0
      %1448 = vmatprep.mubr.f32.mxu0 0.0
      %1449 = vmatmul.mubr.f32.gmra.mxu0 %v1382
      %v1450 = vpop.f32.mrf.mxu0
      %v1451 = vadd.f32 0.0, %v1450
      %v1452 = vpop.f32.mrf.mxu0
      %1453 = vdwg.mxu0
      %1454 = vrot.lane.b32.xlu0 %v876, 112
      %v1455 = vpop.permute.xlu0 %1454
      %v1458 = vsel %vm1028, %v1375, 0
      %1460 = vmatprep.subr.mxu0 0.0
      %1461 = vmatpush1.msra.mxu0 0.0
      %1462 = vmatprep.subr.mxu0 0.0
      %1463 = vmatpush1.msra.mxu0 0.0
      %1464 = vmatprep.subr.mxu0 0.0
      %1465 = vmatpush1.msra.mxu0 0.0
      %1466 = vmatprep.subr.mxu0 0.0
      %1467 = vmatpush1.msra.mxu0 0.0
      %1468 = vmatprep.subr.mxu0 0.0
      %1469 = vmatpush1.msra.mxu0 0.0
      %1470 = vmatprep.subr.mxu0 0.0
      %1471 = vmatpush1.msra.mxu0 0.0
      %1472 = vmatprep.subr.mxu0 0.0
      %1473 = vmatpush1.msra.mxu0 0.0
      %1474 = vmatprep.subr.mxu0 0.0
      %1475 = vmatpush1.msra.mxu0 0.0
      %1476 = vmatprep.subr.mxu0 0.0
      %1477 = vmatpush1.msra.mxu0 0.0
      %1478 = vmatprep.subr.mxu0 0.0
      %1479 = vmatpush1.msra.mxu0 0.0
      %1480 = vmatprep.subr.mxu0 0.0
      %1481 = vmatpush1.msra.mxu0 0.0
      %1482 = vmatprep.subr.mxu0 0.0
      %1483 = vmatpush1.msra.mxu0 0.0
      %1484 = vmatprep.subr.mxu0 0.0
      %1485 = vmatpush1.msra.mxu0 0.0
      %1486 = vmatprep.subr.mxu0 0.0
      %1487 = vmatpush1.msra.mxu0 0.0
      %1488 = vmatprep.subr.mxu0 0.0
      %1489 = vmatpush1.msra.mxu0 0.0
      %1490 = vmatprep.subr.mxu0 0.0
      %1491 = vmatpush1.msra.mxu0 %v1455
      %1492 = vmatprep.subr.mxu0 0.0
      %1493 = vmatpush2.msra.mxu0 0.0
      %1494 = vmatprep.subr.mxu0 0.0
      %1495 = vmatpush2.msra.mxu0 0.0
      %1496 = vmatprep.subr.mxu0 0.0
      %1497 = vmatpush2.msra.mxu0 0.0
      %1498 = vmatprep.subr.mxu0 0.0
      %1499 = vmatpush2.msra.mxu0 0.0
      %1500 = vmatprep.subr.mxu0 0.0
      %1501 = vmatpush2.msra.mxu0 0.0
      %1502 = vmatprep.subr.mxu0 0.0
      %1503 = vmatpush2.msra.mxu0 0.0
      %1504 = vmatprep.subr.mxu0 0.0
      %1505 = vmatpush2.msra.mxu0 0.0
      %1506 = vmatprep.subr.mxu0 0.0
      %1507 = vmatpush2.msra.mxu0 0.0
      %1508 = vmatprep.subr.mxu0 0.0
      %1509 = vmatpush2.msra.mxu0 0.0
      %1510 = vmatprep.subr.mxu0 0.0
      %1511 = vmatpush2.msra.mxu0 0.0
      %1512 = vmatprep.subr.mxu0 0.0
      %1513 = vmatpush2.msra.mxu0 0.0
      %1514 = vmatprep.subr.mxu0 0.0
      %1515 = vmatpush2.msra.mxu0 0.0
      %1516 = vmatprep.subr.mxu0 0.0
      %1517 = vmatpush2.msra.mxu0 0.0
      %1518 = vmatprep.subr.mxu0 0.0
      %1519 = vmatpush2.msra.mxu0 0.0
      %1520 = vmatprep.subr.mxu0 0.0
      %1521 = vmatpush2.msra.mxu0 0.0
      %1522 = vmatprep.subr.mxu0 0.0
      %1523 = vmatpush2.msra.mxu0 0.0
      %1524 = vmatprep.mubr.f32.mxu0 0.0
      %1525 = vmatmul.mubr.f32.gmra.mxu0 %v1458
      %v1526 = vpop.f32.mrf.mxu0
      %v1527 = vadd.f32 0.0, %v1526
      %v1528 = vpop.f32.mrf.mxu0
      %1529 = vdwg.mxu0
      %1530 = vrot.lane.b32.xlu0 %v946, 112
      %v1531 = vpop.permute.xlu0 %1530
      %v1534 = vsel %vm1028, %v1376, 0
      %1536 = vmatprep.subr.mxu0 0.0
      %1537 = vmatpush1.msra.mxu0 0.0
      %1538 = vmatprep.subr.mxu0 0.0
      %1539 = vmatpush1.msra.mxu0 0.0
      %1540 = vmatprep.subr.mxu0 0.0
      %1541 = vmatpush1.msra.mxu0 0.0
      %1542 = vmatprep.subr.mxu0 0.0
      %1543 = vmatpush1.msra.mxu0 0.0
      %1544 = vmatprep.subr.mxu0 0.0
      %1545 = vmatpush1.msra.mxu0 0.0
      %1546 = vmatprep.subr.mxu0 0.0
      %1547 = vmatpush1.msra.mxu0 0.0
      %1548 = vmatprep.subr.mxu0 0.0
      %1549 = vmatpush1.msra.mxu0 0.0
      %1550 = vmatprep.subr.mxu0 0.0
      %1551 = vmatpush1.msra.mxu0 0.0
      %1552 = vmatprep.subr.mxu0 0.0
      %1553 = vmatpush1.msra.mxu0 0.0
      %1554 = vmatprep.subr.mxu0 0.0
      %1555 = vmatpush1.msra.mxu0 0.0
      %1556 = vmatprep.subr.mxu0 0.0
      %1557 = vmatpush1.msra.mxu0 0.0
      %1558 = vmatprep.subr.mxu0 0.0
      %1559 = vmatpush1.msra.mxu0 0.0
      %1560 = vmatprep.subr.mxu0 0.0
      %1561 = vmatpush1.msra.mxu0 0.0
      %1562 = vmatprep.subr.mxu0 0.0
      %1563 = vmatpush1.msra.mxu0 0.0
      %1564 = vmatprep.subr.mxu0 0.0
      %1565 = vmatpush1.msra.mxu0 0.0
      %1566 = vmatprep.subr.mxu0 0.0
      %1567 = vmatpush1.msra.mxu0 %v1531
      %1568 = vmatprep.subr.mxu0 0.0
      %1569 = vmatpush2.msra.mxu0 0.0
      %1570 = vmatprep.subr.mxu0 0.0
      %1571 = vmatpush2.msra.mxu0 0.0
      %1572 = vmatprep.subr.mxu0 0.0
      %1573 = vmatpush2.msra.mxu0 0.0
      %1574 = vmatprep.subr.mxu0 0.0
      %1575 = vmatpush2.msra.mxu0 0.0
      %1576 = vmatprep.subr.mxu0 0.0
      %1577 = vmatpush2.msra.mxu0 0.0
      %1578 = vmatprep.subr.mxu0 0.0
      %1579 = vmatpush2.msra.mxu0 0.0
      %1580 = vmatprep.subr.mxu0 0.0
      %1581 = vmatpush2.msra.mxu0 0.0
      %1582 = vmatprep.subr.mxu0 0.0
      %1583 = vmatpush2.msra.mxu0 0.0
      %1584 = vmatprep.subr.mxu0 0.0
      %1585 = vmatpush2.msra.mxu0 0.0
      %1586 = vmatprep.subr.mxu0 0.0
      %1587 = vmatpush2.msra.mxu0 0.0
      %1588 = vmatprep.subr.mxu0 0.0
      %1589 = vmatpush2.msra.mxu0 0.0
      %1590 = vmatprep.subr.mxu0 0.0
      %1591 = vmatpush2.msra.mxu0 0.0
      %1592 = vmatprep.subr.mxu0 0.0
      %1593 = vmatpush2.msra.mxu0 0.0
      %1594 = vmatprep.subr.mxu0 0.0
      %1595 = vmatpush2.msra.mxu0 0.0
      %1596 = vmatprep.subr.mxu0 0.0
      %1597 = vmatpush2.msra.mxu0 0.0
      %1598 = vmatprep.subr.mxu0 0.0
      %1599 = vmatpush2.msra.mxu0 0.0
      %1600 = vmatprep.mubr.f32.mxu0 0.0
      %1601 = vmatmul.mubr.f32.gmra.mxu0 %v1534
      %v1602 = vpop.f32.mrf.mxu0
      %v1603 = vadd.f32 0.0, %v1602
      %v1604 = vpop.f32.mrf.mxu0
      %1605 = vdwg.mxu0
      %1606 = vrot.lane.b32.xlu0 %v1016, 112
      %v1607 = vpop.permute.xlu0 %1606
      %v1610 = vsel %vm1028, %v1377, 0
      %1612 = vmatprep.subr.mxu0 0.0
      %1613 = vmatpush1.msra.mxu0 0.0
      %1614 = vmatprep.subr.mxu0 0.0
      %1615 = vmatpush1.msra.mxu0 0.0
      %1616 = vmatprep.subr.mxu0 0.0
      %1617 = vmatpush1.msra.mxu0 0.0
      %1618 = vmatprep.subr.mxu0 0.0
      %1619 = vmatpush1.msra.mxu0 0.0
      %1620 = vmatprep.subr.mxu0 0.0
      %1621 = vmatpush1.msra.mxu0 0.0
      %1622 = vmatprep.subr.mxu0 0.0
      %1623 = vmatpush1.msra.mxu0 0.0
      %1624 = vmatprep.subr.mxu0 0.0
      %1625 = vmatpush1.msra.mxu0 0.0
      %1626 = vmatprep.subr.mxu0 0.0
      %1627 = vmatpush1.msra.mxu0 0.0
      %1628 = vmatprep.subr.mxu0 0.0
      %1629 = vmatpush1.msra.mxu0 0.0
      %1630 = vmatprep.subr.mxu0 0.0
      %1631 = vmatpush1.msra.mxu0 0.0
      %1632 = vmatprep.subr.mxu0 0.0
      %1633 = vmatpush1.msra.mxu0 0.0
      %1634 = vmatprep.subr.mxu0 0.0
      %1635 = vmatpush1.msra.mxu0 0.0
      %1636 = vmatprep.subr.mxu0 0.0
      %1637 = vmatpush1.msra.mxu0 0.0
      %1638 = vmatprep.subr.mxu0 0.0
      %1639 = vmatpush1.msra.mxu0 0.0
      %1640 = vmatprep.subr.mxu0 0.0
      %1641 = vmatpush1.msra.mxu0 0.0
      %1642 = vmatprep.subr.mxu0 0.0
      %1643 = vmatpush1.msra.mxu0 %v1607
      %1644 = vmatprep.subr.mxu0 0.0
      %1645 = vmatpush2.msra.mxu0 0.0
      %1646 = vmatprep.subr.mxu0 0.0
      %1647 = vmatpush2.msra.mxu0 0.0
      %1648 = vmatprep.subr.mxu0 0.0
      %1649 = vmatpush2.msra.mxu0 0.0
      %1650 = vmatprep.subr.mxu0 0.0
      %1651 = vmatpush2.msra.mxu0 0.0
      %1652 = vmatprep.subr.mxu0 0.0
      %1653 = vmatpush2.msra.mxu0 0.0
      %1654 = vmatprep.subr.mxu0 0.0
      %1655 = vmatpush2.msra.mxu0 0.0
      %1656 = vmatprep.subr.mxu0 0.0
      %1657 = vmatpush2.msra.mxu0 0.0
      %1658 = vmatprep.subr.mxu0 0.0
      %1659 = vmatpush2.msra.mxu0 0.0
      %1660 = vmatprep.subr.mxu0 0.0
      %1661 = vmatpush2.msra.mxu0 0.0
      %1662 = vmatprep.subr.mxu0 0.0
      %1663 = vmatpush2.msra.mxu0 0.0
      %1664 = vmatprep.subr.mxu0 0.0
      %1665 = vmatpush2.msra.mxu0 0.0
      %1666 = vmatprep.subr.mxu0 0.0
      %1667 = vmatpush2.msra.mxu0 0.0
      %1668 = vmatprep.subr.mxu0 0.0
      %1669 = vmatpush2.msra.mxu0 0.0
      %1670 = vmatprep.subr.mxu0 0.0
      %1671 = vmatpush2.msra.mxu0 0.0
      %1672 = vmatprep.subr.mxu0 0.0
      %1673 = vmatpush2.msra.mxu0 0.0
      %1674 = vmatprep.subr.mxu0 0.0
      %1675 = vmatpush2.msra.mxu0 0.0
      %1676 = vmatprep.mubr.f32.mxu0 0.0
      %1677 = vmatmul.mubr.f32.gmra.mxu0 %v1610
      %v1678 = vpop.f32.mrf.mxu0
      %v1679 = vadd.f32 0.0, %v1678
      %v1680 = vpop.f32.mrf.mxu0
      %1681 = vdwg.mxu0
      %1682 = vst.msk [vmem:[#allocation2] sm:$0xff] %vm1028, %v1451
      %1684 = vrot.lane.b32.xlu0 %v1527, 8
      %v1685 = vpop.permute.xlu0 %1684
      %vm1687 = vcmask 130112
      %1688 = vst.msk [vmem:[#allocation2] sm:$0xff] %vm1687, %v1685
      %1690 = vrot.lane.b32.xlu0 %v1603, 16
      %v1691 = vpop.permute.xlu0 %1690
      %vm1693 = vcmask 195712
      %1694 = vst.msk [vmem:[#allocation2] sm:$0xff] %vm1693, %v1691
      %1696 = vrot.lane.b32.xlu0 %v1679, 24
      %v1697 = vpop.permute.xlu0 %1696
      %vm1699 = vcmask 261312
      %1700 = vst.msk [vmem:[#allocation2] sm:$0xff] %vm1699, %v1697
      %v1701 = vld [vmem:[#allocation2] sm:$0xff]
      %v1702 = vadd.f32 %v1701, %v687
      %v1703 = vld [vmem:[%s636] sm:$0x1]
      %v1704 = vld [vmem:[%s639] sm:$0x1]
      %v1705 = vsel %vm735, %v1702, 0.0
      %1706 = vadd.xlane.f32.xlu0 %v1705
      %v1707 = vpop.xlane.xlu0 %1706
      %v1708 = vrcp.pop 32.0
      %v1709 = vmul.f32 %v1707, %v1708
      %v1710 = vsub.f32 %v1702, %v1709
      %v1711 = vmul.f32 %v1710, %v1710
      %v1712 = vsel %vm735, %v1711, 0.0
      %1713 = vadd.xlane.f32.xlu0 %v1712
      %v1714 = vpop.xlane.xlu0 %1713
      %v1715 = vmul.f32 %v1714, %v1708
      %v1716 = vadd.f32 %v1715, 1e-05
      %v1717 = vrsqrt.pop %v1716
      %v1718 = vmul.f32 %v1710, %v1717
      %v1720 = vlaneseq
      %v1721 = vshrl.u32 %v1720, 7
      %v1722 = vsub.s32 0, %v1721
      %v1723 = vrot.slane %v1703, %v1722
      %v1725 = vmul.f32 %v1718, %v1723
      %v1727 = vlaneseq
      %v1728 = vshrl.u32 %v1727, 7
      %v1729 = vsub.s32 0, %v1728
      %v1730 = vrot.slane %v1704, %v1729
      %v1732 = vadd.f32 %v1725, %v1730
      %v1733 = vld [vmem:[%s622] sm:$0xff]
      %v1734 = vld [vmem:[%s622 + $0x8] sm:$0xff]
      %v1735 = vld [vmem:[%s622 + $0x10] sm:$0xff]
      %v1736 = vld [vmem:[%s622 + $0x18] sm:$0xff]
      %v1737 = vld [vmem:[%s625] sm:$0x1]
      %v1739 = vlaneseq
      %v1740 = vshrl.u32 %v1739, 7
      %v1741 = vsub.s32 0, %v1740
      %v1742 = vrot.slane %v1737, %v1741
      %v1745 = vsel %vm735, %v1732, 0
      %1747 = vmatprep.subr.mxu0 0.0
      %1748 = vmatpush1.msra.mxu0 0.0
      %1749 = vmatprep.subr.mxu0 0.0
      %1750 = vmatpush1.msra.mxu0 0.0
      %1751 = vmatprep.subr.mxu0 0.0
      %1752 = vmatpush1.msra.mxu0 0.0
      %1753 = vmatprep.subr.mxu0 0.0
      %1754 = vmatpush1.msra.mxu0 0.0
      %1755 = vmatprep.subr.mxu0 0.0
      %1756 = vmatpush1.msra.mxu0 0.0
      %1757 = vmatprep.subr.mxu0 0.0
      %1758 = vmatpush1.msra.mxu0 0.0
      %1759 = vmatprep.subr.mxu0 0.0
      %1760 = vmatpush1.msra.mxu0 0.0
      %1761 = vmatprep.subr.mxu0 0.0
      %1762 = vmatpush1.msra.mxu0 0.0
      %1763 = vmatprep.subr.mxu0 0.0
      %1764 = vmatpush1.msra.mxu0 0.0
      %1765 = vmatprep.subr.mxu0 0.0
      %1766 = vmatpush1.msra.mxu0 0.0
      %1767 = vmatprep.subr.mxu0 0.0
      %1768 = vmatpush1.msra.mxu0 0.0
      %1769 = vmatprep.subr.mxu0 0.0
      %1770 = vmatpush1.msra.mxu0 0.0
      %1771 = vmatprep.subr.mxu0 0.0
      %1772 = vmatpush1.msra.mxu0 %v1736
      %1773 = vmatprep.subr.mxu0 0.0
      %1774 = vmatpush1.msra.mxu0 %v1735
      %1775 = vmatprep.subr.mxu0 0.0
      %1776 = vmatpush1.msra.mxu0 %v1734
      %1777 = vmatprep.subr.mxu0 0.0
      %1778 = vmatpush1.msra.mxu0 %v1733
      %1779 = vmatprep.subr.mxu0 0.0
      %1780 = vmatpush2.msra.mxu0 0.0
      %1781 = vmatprep.subr.mxu0 0.0
      %1782 = vmatpush2.msra.mxu0 0.0
      %1783 = vmatprep.subr.mxu0 0.0
      %1784 = vmatpush2.msra.mxu0 0.0
      %1785 = vmatprep.subr.mxu0 0.0
      %1786 = vmatpush2.msra.mxu0 0.0
      %1787 = vmatprep.subr.mxu0 0.0
      %1788 = vmatpush2.msra.mxu0 0.0
      %1789 = vmatprep.subr.mxu0 0.0
      %1790 = vmatpush2.msra.mxu0 0.0
      %1791 = vmatprep.subr.mxu0 0.0
      %1792 = vmatpush2.msra.mxu0 0.0
      %1793 = vmatprep.subr.mxu0 0.0
      %1794 = vmatpush2.msra.mxu0 0.0
      %1795 = vmatprep.subr.mxu0 0.0
      %1796 = vmatpush2.msra.mxu0 0.0
      %1797 = vmatprep.subr.mxu0 0.0
      %1798 = vmatpush2.msra.mxu0 0.0
      %1799 = vmatprep.subr.mxu0 0.0
      %1800 = vmatpush2.msra.mxu0 0.0
      %1801 = vmatprep.subr.mxu0 0.0
      %1802 = vmatpush2.msra.mxu0 0.0
      %1803 = vmatprep.subr.mxu0 0.0
      %1804 = vmatpush2.msra.mxu0 0.0
      %1805 = vmatprep.subr.mxu0 0.0
      %1806 = vmatpush2.msra.mxu0 0.0
      %1807 = vmatprep.subr.mxu0 0.0
      %1808 = vmatpush2.msra.mxu0 0.0
      %1809 = vmatprep.subr.mxu0 0.0
      %1810 = vmatpush2.msra.mxu0 0.0
      %1811 = vmatprep.mubr.f32.mxu0 0.0
      %1812 = vmatmul.mubr.f32.gmra.mxu0 %v1745
      %v1813 = vpop.f32.mrf.mxu0
      %v1814 = vadd.f32 %v1742, %v1813
      %v1815 = vpop.f32.mrf.mxu0
      %1816 = vdwg.mxu0
      %v1817 = vmul.f32 %v1814, 0.5
      %v1818 = vmul.f32 %v1814, 0.70710677
      %v1819 = vand.u32 2147483647, %v1818
      %v1820 = vmul.f32 %v1819, 0.3275911
      %v1821 = vadd.f32 %v1820, 1.0
      %v1822 = vrcp.pop %v1821
      %v1823 = vmul.f32 1.0, %v1822
      %v1824 = vmul.f32 %v1823, 1.0614054
      %v1825 = vadd.f32 %v1824, -1.4531521
      %v1826 = vmul.f32 %v1825, %v1823
      %v1827 = vadd.f32 %v1826, 1.4214138
      %v1828 = vmul.f32 %v1827, %v1823
      %v1829 = vadd.f32 %v1828, -0.28449672
      %v1830 = vmul.f32 %v1829, %v1823
      %v1831 = vadd.f32 %v1830, 0.2548296
      %v1832 = vmul.f32 %v1831, %v1823
      %v1833 = vsub.f32 0.0, %v1819
      %v1834 = vmul.f32 %v1833, %v1819
      %v1835 = vmul.f32 %v1834, 1.442695
      %v1836 = vpow.pop %v1835
      %v1837 = vmul.f32 %v1832, %v1836
      %v1838 = vsub.f32 1.0, %v1837
      %vm1839 = vcmp.lt.f32.partialorder %v1818, 0.0
      %v1840 = vsub.f32 0.0, %v1838
      %v1841 = vsel %vm1839, %v1840, %v1838
      %v1842 = vadd.f32 %v1841, 1.0
      %v1843 = vmul.f32 %v1817, %v1842
      %v1844 = vld [vmem:[%s630] sm:$0xff]
      %v1845 = vld [vmem:[%s630 + $0x8] sm:$0xff]
      %v1846 = vld [vmem:[%s630 + $0x10] sm:$0xff]
      %v1847 = vld [vmem:[%s630 + $0x18] sm:$0xff]
      %v1848 = vld [vmem:[%s630 + $0x20] sm:$0xff]
      %v1849 = vld [vmem:[%s630 + $0x28] sm:$0xff]
      %v1850 = vld [vmem:[%s630 + $0x30] sm:$0xff]
      %v1851 = vld [vmem:[%s630 + $0x38] sm:$0xff]
      %v1852 = vld [vmem:[%s633] sm:$0x1]
      %v1854 = vlaneseq
      %v1855 = vshrl.u32 %v1854, 7
      %v1856 = vsub.s32 0, %v1855
      %v1857 = vrot.slane %v1852, %v1856
      %vm1859 = vcmask 523264
      %v1861 = vsel %vm1859, %v1843, 0
      %1863 = vmatprep.subr.mxu0 0.0
      %1864 = vmatpush1.msra.mxu0 0.0
      %1865 = vmatprep.subr.mxu0 0.0
      %1866 = vmatpush1.msra.mxu0 0.0
      %1867 = vmatprep.subr.mxu0 0.0
      %1868 = vmatpush1.msra.mxu0 0.0
      %1869 = vmatprep.subr.mxu0 0.0
      %1870 = vmatpush1.msra.mxu0 0.0
      %1871 = vmatprep.subr.mxu0 0.0
      %1872 = vmatpush1.msra.mxu0 0.0
      %1873 = vmatprep.subr.mxu0 0.0
      %1874 = vmatpush1.msra.mxu0 0.0
      %1875 = vmatprep.subr.mxu0 0.0
      %1876 = vmatpush1.msra.mxu0 0.0
      %1877 = vmatprep.subr.mxu0 0.0
      %1878 = vmatpush1.msra.mxu0 0.0
      %1879 = vmatprep.subr.mxu0 0.0
      %1880 = vmatpush1.msra.mxu0 %v1851
      %1881 = vmatprep.subr.mxu0 0.0
      %1882 = vmatpush1.msra.mxu0 %v1850
      %1883 = vmatprep.subr.mxu0 0.0
      %1884 = vmatpush1.msra.mxu0 %v1849
      %1885 = vmatprep.subr.mxu0 0.0
      %1886 = vmatpush1.msra.mxu0 %v1848
      %1887 = vmatprep.subr.mxu0 0.0
      %1888 = vmatpush1.msra.mxu0 %v1847
      %1889 = vmatprep.subr.mxu0 0.0
      %1890 = vmatpush1.msra.mxu0 %v1846
      %1891 = vmatprep.subr.mxu0 0.0
      %1892 = vmatpush1.msra.mxu0 %v1845
      %1893 = vmatprep.subr.mxu0 0.0
      %1894 = vmatpush1.msra.mxu0 %v1844
      %1895 = vmatprep.subr.mxu0 0.0
      %1896 = vmatpush2.msra.mxu0 0.0
      %1897 = vmatprep.subr.mxu0 0.0
      %1898 = vmatpush2.msra.mxu0 0.0
      %1899 = vmatprep.subr.mxu0 0.0
      %1900 = vmatpush2.msra.mxu0 0.0
      %1901 = vmatprep.subr.mxu0 0.0
      %1902 = vmatpush2.msra.mxu0 0.0
      %1903 = vmatprep.subr.mxu0 0.0
      %1904 = vmatpush2.msra.mxu0 0.0
      %1905 = vmatprep.subr.mxu0 0.0
      %1906 = vmatpush2.msra.mxu0 0.0
      %1907 = vmatprep.subr.mxu0 0.0
      %1908 = vmatpush2.msra.mxu0 0.0
      %1909 = vmatprep.subr.mxu0 0.0
      %1910 = vmatpush2.msra.mxu0 0.0
      %1911 = vmatprep.subr.mxu0 0.0
      %1912 = vmatpush2.msra.mxu0 0.0
      %1913 = vmatprep.subr.mxu0 0.0
      %1914 = vmatpush2.msra.mxu0 0.0
      %1915 = vmatprep.subr.mxu0 0.0
      %1916 = vmatpush2.msra.mxu0 0.0
      %1917 = vmatprep.subr.mxu0 0.0
      %1918 = vmatpush2.msra.mxu0 0.0
      %1919 = vmatprep.subr.mxu0 0.0
      %1920 = vmatpush2.msra.mxu0 0.0
      %1921 = vmatprep.subr.mxu0 0.0
      %1922 = vmatpush2.msra.mxu0 0.0
      %1923 = vmatprep.subr.mxu0 0.0
      %1924 = vmatpush2.msra.mxu0 0.0
      %1925 = vmatprep.subr.mxu0 0.0
      %1926 = vmatpush2.msra.mxu0 0.0
      %1927 = vmatprep.mubr.f32.mxu0 0.0
      %1928 = vmatmul.mubr.f32.gmra.mxu0 %v1861
      %v1929 = vpop.f32.mrf.mxu0
      %v1930 = vadd.f32 %v1857, %v1929
      %v1931 = vpop.f32.mrf.mxu0
      %1932 = vdwg.mxu0
      %v1933 = vadd.f32 %v1930, %v1732
      %v1934 = vld [vmem:[%s642] sm:$0x1]
      %v1935 = vld [vmem:[%s645] sm:$0x1]
      %v1936 = vsel %vm735, %v1933, 0.0
      %1937 = vadd.xlane.f32.xlu0 %v1936
      %v1938 = vpop.xlane.xlu0 %1937
      %v1939 = vmul.f32 %v1938, %v1708
      %v1940 = vsub.f32 %v1933, %v1939
      %v1941 = vmul.f32 %v1940, %v1940
      %v1942 = vsel %vm735, %v1941, 0.0
      %1943 = vadd.xlane.f32.xlu0 %v1942
      %v1944 = vpop.xlane.xlu0 %1943
      %v1945 = vmul.f32 %v1944, %v1708
      %v1946 = vadd.f32 %v1945, 1e-05
      %v1947 = vrsqrt.pop %v1946
      %v1948 = vmul.f32 %v1940, %v1947
      %v1950 = vlaneseq
      %v1951 = vshrl.u32 %v1950, 7
      %v1952 = vsub.s32 0, %v1951
      %v1953 = vrot.slane %v1934, %v1952
      %v1955 = vmul.f32 %v1948, %v1953
      %v1957 = vlaneseq
      %v1958 = vshrl.u32 %v1957, 7
      %v1959 = vsub.s32 0, %v1958
      %v1960 = vrot.slane %v1935, %v1959
      %v1962 = vadd.f32 %v1955, %v1960
      %1963 = vst.msk [vmem:[%s649] sm:$0xff] %vm735, %v1962
      %p1964 = scmp.lt.s32.totalorder %s29, 1
      %s1965 = scalar_select %p1964, %s29, 1
      %s1966 = smul.addr %s1965, 8
      %s1967 = scalar_lea.vmem %s14, %s1966
      // Predicated region
      $region81: #{jarvis_forward.2} parent=75 // pred_check
        %p1968 = pneg %p409
      $region82: #{jarvis_forward.2} parent=75 // pred_check_branch
        %1970 = sbr.rel (%p1968) target = $region84
      $region83: #{jarvis_forward.2} parent=75 // pred_region
        _
      $region84: #{jarvis_forward.2} parent=75 // pred_fallthru
        _
    $region76: #{jarvis_forward.2} parent=5 // pred_fallthru
      _
    %p1971 = scmp.le.s32.totalorder 2, %s20
    // Predicated region
    $region85: #{jarvis_forward.2} parent=5 // pred_check
      %p1972 = pneg %p1971
    $region86: #{jarvis_forward.2} parent=5 // pred_check_branch
      %1974 = sbr.rel (%p1972) target = $region88
    $region87: #{jarvis_forward.2} parent=5 // pred_region
      %s1975 = ssub.s32 %s20, 2
      // Predicated region
      $region89: #{jarvis_forward.2} parent=87 // pred_check
        %p1976 = pneg %p415
      $region90: #{jarvis_forward.2} parent=87 // pred_check_branch
        %1978 = sbr.rel (%p1976) target = $region92
      $region91: #{jarvis_forward.2} parent=87 // pred_region
        %p1979 = scmp.lt.s32.totalorder %s31, 1
        %s1980 = scalar_select %p1979, %s31, 1
        %s1981 = smul.addr %s1980, 8
        %s1982 = scalar_lea.vmem %s14, %s1981
      $region92: #{jarvis_forward.2} parent=87 // pred_fallthru
        _
    $region88: #{jarvis_forward.2} parent=5 // pred_fallthru
      _
  $region6: #{jarvis_forward.2} parent=0 // loop_footer
    %s24 = sadd.s32 1, %s20
  $region7: #{jarvis_forward.2} parent=0 // loop_footer_branch
    %19 = sbr.rel target = $region3
  $region8: #{jarvis_forward.2} parent=0 // loop_exit
    _

</llo_original>
